<compile_context>
chip_gen: v7x
topology: tpu7x:2x2x1
jax: 0.10.0
libtpu: 0.0.40
codegen_flags: <defaults>
</compile_context>

<pallas_src>
import functools

import jax
import jax.numpy as jnp
from jax import lax
from jax.experimental import pallas as pl
from jax.experimental.pallas import tpu as pltpu


def _waveblock_kernel(x_ref, w0_ref, b0_ref, wfg_ref, bfg_ref, wc_ref, cb_ref,
                      out_ref, stacked_ref, *, num_rates, kernel_size,
                      seq_len, padded_len):
    """One column tile (whole batch elements) per grid step.

    Shapes seen by the kernel (cols = batches_per_tile * padded_len):
      x_ref      : (C_in, cols)
      w0_ref     : (OC, C_in)           b0_ref : (OC, 1)
      wfg_ref    : (R, 2*OC, K*OC)      bfg_ref: (R, 2*OC, 1)
      wc_ref     : (R, OC, OC)          cb_ref : (R, OC, 1)
      out_ref    : (OC, cols)
      stacked_ref: (K*OC, cols)  VMEM scratch (persistent, fully overwritten)
    """
    K = kernel_size
    L = seq_len                     # real sequence length (conv padding bound)
    Lp = padded_len                 # lane-padded per-batch block length
    oc = wc_ref.shape[1]

    x = x_ref[...]                  # (C_in, cols), f32
    cols = x.shape[-1]

    # Position within each batch element (columns are consecutive Lp blocks).
    t_local = lax.broadcasted_iota(jnp.int32, (1, cols), 1) % Lp

    # convs[0]: 1x1 conv == channel-mixing matmul + lane-broadcast bias.
    y = jnp.dot(w0_ref[...], x, preferred_element_type=jnp.float32) + b0_ref[...]
    res = y

    for i in range(num_rates):
        d = 2 ** i
        p = d * (K - 1) // 2
        offsets = [k * d - p for k in range(K)]

        # Hoisted boundary masks, one per nonzero tap offset (reused below).
        # Valid iff the source column t + off lies inside the real sequence:
        # reproduces Conv1d zero padding, blocks cross-batch / wrap leakage,
        # and keeps the lane-padded tail from contaminating real columns.
        masks = {off: (t_local >= -off) & (t_local < L - off)
                 for off in offsets if off != 0}

        # Write the K shifted views straight into the persistent VMEM scratch
        # (no per-layer concatenate temp). Row block k holds y[:, t + off_k].
        for k, off in enumerate(offsets):
            if off == 0:
                v = y
            else:
                v = pltpu.roll(y, shift=(-off) % cols, axis=1)   # XLU rotate
                v = jnp.where(masks[off], v, 0.0)
            stacked_ref[pl.ds(k * oc, oc), :] = v

        # Single fused MXU matmul for filter AND gate; bias broadcast-added.
        fg = jnp.dot(wfg_ref[i], stacked_ref[...],
                     preferred_element_type=jnp.float32) + bfg_ref[i]
        z = jnp.tanh(fg[:oc, :]) * jax.nn.sigmoid(fg[oc:, :])

        # convs[i + 1]: 1x1 conv.
        y = jnp.dot(wc_ref[i], z, preferred_element_type=jnp.float32) + cb_ref[i]
        res = res + y

    out_ref[...] = res.astype(out_ref.dtype)


def _pick_batches_per_tile(B, Lp, target_cols=1024):
    """Largest divisor of B with tile_cols <= target, keeping >=2 grid steps."""
    best = 1
    for c in range(1, B + 1):
        if B % c == 0 and c * Lp <= target_cols and B // c >= min(2, B):
            best = c
    return best


def waveblock_pallas(x, params, *, num_rates, kernel_size):
    """x: (B, C_in, L) float32. Returns (B, OC, L) float32."""
    B, C_in, L = x.shape
    w0, b0, wfg, bfg, wc, cb = params
    OC = w0.shape[0]
    R = wfg.shape[0]
    K = kernel_size
    assert R == num_rates
    assert K % 2 == 1, "kernel_size must be odd for 'same'-length output"

    # Pad each sequence to a multiple of 128 so every store is a full-width,
    # unmasked lane-dense vst (padded tail is masked out and sliced off).
    Lp = ((L + 127) // 128) * 128
    if Lp != L:
        x = jnp.pad(x, ((0, 0), (0, 0), (0, Lp - L)))
    x_slab = jnp.transpose(x, (1, 0, 2)).reshape(C_in, B * Lp)

    # Column tiling on whole-batch-element boundaries (no halo needed).
    bpt = _pick_batches_per_tile(B, Lp)
    tile_cols = bpt * Lp
    n_tiles = B // bpt

    full = lambda a: pl.BlockSpec(a.shape, lambda j: (0,) * a.ndim)

    kernel = functools.partial(_waveblock_kernel, num_rates=num_rates,
                               kernel_size=K, seq_len=L, padded_len=Lp)

    # Explicit VMEM budget from the per-tile live footprint (+ headroom):
    #   live f32 rows ~ x + y + res + fg + z + stacked scratch
    live_rows = C_in + 5 * OC + K * OC
    weight_bytes = sum(int(a.size) * 4 for a in (w0, b0, wfg, bfg, wc, cb))
    tile_bytes = live_rows * tile_cols * 4
    io_bytes = 2 * (C_in + OC) * tile_cols * 4          # double-buffered in/out
    vmem_limit = int(min(96 * 1024 * 1024,
                         max(16 * 1024 * 1024,
                             4 * (tile_bytes + io_bytes + weight_bytes))))

    out_slab = pl.pallas_call(
        kernel,
        out_shape=jax.ShapeDtypeStruct((OC, B * Lp), jnp.float32),
        grid_spec=pltpu.PrefetchScalarGridSpec(
            num_scalar_prefetch=0,
            grid=(n_tiles,),
            in_specs=[pl.BlockSpec((C_in, tile_cols), lambda j: (0, j)),
                      full(w0), full(b0), full(wfg), full(bfg),
                      full(wc), full(cb)],
            out_specs=pl.BlockSpec((OC, tile_cols), lambda j: (0, j)),
            scratch_shapes=[pltpu.VMEM((K * OC, tile_cols), jnp.float32)],
        ),
        compiler_params=pltpu.CompilerParams(
            dimension_semantics=("parallel",),
            vmem_limit_bytes=vmem_limit),
    )(x_slab, w0, b0, wfg, bfg, wc, cb)

    out = jnp.transpose(out_slab.reshape(OC, B, Lp), (1, 0, 2))
    return out[:, :, :L]


def pack_params(w0_full, b0, fw_full, fb, gw_full, gb, cw_full, cb):
    """Repack PyTorch-layout Conv1d weights for the fused kernel."""
    R, OC, _, K = fw_full.shape
    w0 = w0_full[:, :, 0]                                      # (OC, C_in)
    # (R, OC_out, IC, K) -> (R, OC_out, K*IC), column index = k*IC + c
    fw_flat = jnp.transpose(fw_full, (0, 1, 3, 2)).reshape(R, OC, K * OC)
    gw_flat = jnp.transpose(gw_full, (0, 1, 3, 2)).reshape(R, OC, K * OC)
    wfg = jnp.concatenate([fw_flat, gw_flat], axis=1)          # (R, 2*OC, K*OC)
    bfg = jnp.concatenate([fb, gb], axis=1)[:, :, None]        # (R, 2*OC, 1)
    wc = cw_full[:, :, :, 0]                                   # (R, OC, OC)
    return (w0, b0[:, None], wfg, bfg, wc, cb[:, :, None])


# ---------------- pure-JAX reference (for correctness check) ----------------
def _conv1d_ref(x, w, b, dilation=1, padding=0):
    # x: (B, C, L), w: (OC, IC, K), b: (OC,)
    y = lax.conv_general_dilated(
        x, w, window_strides=(1,), padding=[(padding, padding)],
        rhs_dilation=(dilation,), dimension_numbers=("NCH", "OIH", "NCH"))
    return y + b[None, :, None]


def waveblock_ref(x, raw_params, *, num_rates, kernel_size):
    w0, b0, fw_list, fb_list, gw_list, gb_list, cw_list, cb_list = raw_params
    y = _conv1d_ref(x, w0, b0)
    res = y
    for i in range(num_rates):
        d = 2 ** i
        p = d * (kernel_size - 1) // 2
        f = _conv1d_ref(y, fw_list[i], fb_list[i], dilation=d, padding=p)
        g = _conv1d_ref(y, gw_list[i], gb_list[i], dilation=d, padding=p)
        z = jnp.tanh(f) * jax.nn.sigmoid(g)
        y = _conv1d_ref(z, cw_list[i], cb_list[i])
        res = res + y
    return res


# ---------------------------------- main ------------------------------------
if __name__ == "__main__":
    # Module hyperparameters (small, consistent with the PyTorch __init__).
    IN_CH, OUT_CH = 4, 16
    NUM_RATES = 3          # dilation_rates -> dilations 1, 2, 4
    K = 3                  # kernel_size (odd -> 'same'-length output)
    B, L = 2, 128

    key = jax.random.PRNGKey(0)
    keys = jax.random.split(key, 16)

    # Deterministic synthetic parameters (PyTorch Conv1d weight layout: OC,IC,K)
    scale = 0.2
    w0_full = jax.random.normal(keys[0], (OUT_CH, IN_CH, 1), jnp.float32) * scale
    b0 = jax.random.normal(keys[1], (OUT_CH,), jnp.float32) * scale
    fw_full = jax.random.normal(keys[2], (NUM_RATES, OUT_CH, OUT_CH, K), jnp.float32) * scale
    fb = jax.random.normal(keys[3], (NUM_RATES, OUT_CH), jnp.float32) * scale
    gw_full = jax.random.normal(keys[4], (NUM_RATES, OUT_CH, OUT_CH, K), jnp.float32) * scale
    gb = jax.random.normal(keys[5], (NUM_RATES, OUT_CH), jnp.float32) * scale
    cw_full = jax.random.normal(keys[6], (NUM_RATES, OUT_CH, OUT_CH, 1), jnp.float32) * scale
    cb = jax.random.normal(keys[7], (NUM_RATES, OUT_CH), jnp.float32) * scale

    x = jax.random.normal(keys[8], (B, IN_CH, L), jnp.float32)

    params = pack_params(w0_full, b0, fw_full, fb, gw_full, gb, cw_full, cb)

    out = waveblock_pallas(x, params, num_rates=NUM_RATES, kernel_size=K)
    out = jax.block_until_ready(out)

    # Correctness check against a plain-JAX reference of the PyTorch forward.
    raw_params = (w0_full, b0,
                  [fw_full[i] for i in range(NUM_RATES)],
                  [fb[i] for i in range(NUM_RATES)],
                  [gw_full[i] for i in range(NUM_RATES)],
                  [gb[i] for i in range(NUM_RATES)],
                  [cw_full[i] for i in range(NUM_RATES)],
                  [cb[i] for i in range(NUM_RATES)])
    ref = waveblock_ref(x, raw_params, num_rates=NUM_RATES, kernel_size=K)
    assert out.shape == (B, OUT_CH, L)
    assert jnp.allclose(out, ref, rtol=5e-4, atol=5e-4), \
        f"max abs err = {jnp.max(jnp.abs(out - ref))}"

    print("KERNEL_OK")
</pallas_src>

<mosaic_0001>
module attributes {stable_mosaic.version = 11 : i64} {
  func.func @_waveblock_kernel(%arg0: i32, %arg1: memref<4x128xf32, #tpu.memory_space<vmem>>, %arg2: memref<16x4xf32, #tpu.memory_space<vmem>>, %arg3: memref<16x1xf32, #tpu.memory_space<vmem>>, %arg4: memref<3x32x48xf32, #tpu.memory_space<vmem>>, %arg5: memref<3x32x1xf32, #tpu.memory_space<vmem>>, %arg6: memref<3x16x16xf32, #tpu.memory_space<vmem>>, %arg7: memref<3x16x1xf32, #tpu.memory_space<vmem>>, %arg8: memref<16x128xf32, #tpu.memory_space<vmem>>, %arg9: memref<48x128xf32, #tpu.memory_space<vmem>>) attributes {dimension_semantics = [#tpu.dimension_semantics<parallel>], iteration_bounds = array<i64: 2>, scalar_prefetch = 0 : i64, scratch_operands = 1 : i64, tpu.core_type = #tpu.core_type<tc>, window_params = [{transform_indices = @transform_0, window_bounds = array<i64: 4, 128>}, {pipeline_mode = #tpu.pipeline_mode<synchronous>, transform_indices = @transform_1, window_bounds = array<i64: 16, 4>}, {pipeline_mode = #tpu.pipeline_mode<synchronous>, transform_indices = @transform_2, window_bounds = array<i64: 16, 1>}, {pipeline_mode = #tpu.pipeline_mode<synchronous>, transform_indices = @transform_3, window_bounds = array<i64: 3, 32, 48>}, {pipeline_mode = #tpu.pipeline_mode<synchronous>, transform_indices = @transform_4, window_bounds = array<i64: 3, 32, 1>}, {pipeline_mode = #tpu.pipeline_mode<synchronous>, transform_indices = @transform_5, window_bounds = array<i64: 3, 16, 16>}, {pipeline_mode = #tpu.pipeline_mode<synchronous>, transform_indices = @transform_6, window_bounds = array<i64: 3, 16, 1>}, {transform_indices = @transform_7, window_bounds = array<i64: 16, 128>}]} {
    %c0 = arith.constant 0 : index
    %c0_0 = arith.constant 0 : index
    %0 = vector.load %arg1[%c0, %c0_0] : memref<4x128xf32, #tpu.memory_space<vmem>>, vector<4x128xf32>
    %1 = tpu.iota {dimensions = array<i32: 1>} : vector<1x128xi32>
    %c128_i32 = arith.constant 128 : i32
    %c0_i32 = arith.constant 0 : i32
    %2 = arith.cmpi eq, %c128_i32, %c0_i32 : i32
    %c1_i32 = arith.constant 1 : i32
    %3 = arith.select %2, %c1_i32, %c128_i32 : i32
    %4 = vector.broadcast %3 : i32 to vector<1x128xi32>
    %5 = arith.remsi %1, %4 : vector<1x128xi32>
    %c0_i32_1 = arith.constant 0 : i32
    %6 = vector.broadcast %c0_i32_1 : i32 to vector<1x128xi32>
    %7 = arith.cmpi ne, %5, %6 : vector<1x128xi32>
    %c0_i32_2 = arith.constant 0 : i32
    %8 = vector.broadcast %c0_i32_2 : i32 to vector<1x128xi32>
    %9 = arith.cmpi slt, %5, %8 : vector<1x128xi32>
    %c0_i32_3 = arith.constant 0 : i32
    %10 = arith.cmpi slt, %3, %c0_i32_3 : i32
    %11 = vector.broadcast %10 : i1 to vector<1x128xi1>
    %12 = vector.broadcast %11 : vector<1x128xi1> to vector<1x128xi1>
    %13 = arith.xori %9, %12 : vector<1x128xi1>
    %14 = arith.andi %13, %7 : vector<1x128xi1>
    %15 = vector.broadcast %3 : i32 to vector<1x128xi32>
    %16 = arith.addi %5, %15 : vector<1x128xi32>
    %17 = arith.select %14, %16, %5 : vector<1x128xi1>, vector<1x128xi32>
    %c0_4 = arith.constant 0 : index
    %c0_5 = arith.constant 0 : index
    %18 = vector.load %arg2[%c0_4, %c0_5] : memref<16x4xf32, #tpu.memory_space<vmem>>, vector<16x4xf32>
    %cst = arith.constant dense<0.000000e+00> : vector<16x128xf32>
    %19 = tpu.matmul %18, %0, %cst {dimension_numbers = #tpu.dot_dimension_numbers<[1], [0], [0], [1], [0, 0, 1, 1], [], []>} : vector<16x4xf32>, vector<4x128xf32>, vector<16x128xf32> -> vector<16x128xf32>
    %c0_6 = arith.constant 0 : index
    %c0_7 = arith.constant 0 : index
    %20 = vector.load %arg3[%c0_6, %c0_7] : memref<16x1xf32, #tpu.memory_space<vmem>>, vector<16x1xf32>
    %21 = vector.broadcast %20 : vector<16x1xf32> to vector<16x128xf32>
    %22 = arith.addf %19, %21 : vector<16x128xf32>
    %c1_i32_8 = arith.constant 1 : i32
    %23 = vector.broadcast %c1_i32_8 : i32 to vector<1x128xi32>
    %24 = arith.cmpi sge, %17, %23 : vector<1x128xi32>
    %c129_i32 = arith.constant 129 : i32
    %25 = vector.broadcast %c129_i32 : i32 to vector<1x128xi32>
    %26 = arith.cmpi slt, %17, %25 : vector<1x128xi32>
    %27 = arith.andi %24, %26 : vector<1x128xi1>
    %c-1_i32 = arith.constant -1 : i32
    %28 = vector.broadcast %c-1_i32 : i32 to vector<1x128xi32>
    %29 = arith.cmpi sge, %17, %28 : vector<1x128xi32>
    %c127_i32 = arith.constant 127 : i32
    %30 = vector.broadcast %c127_i32 : i32 to vector<1x128xi32>
    %31 = arith.cmpi slt, %17, %30 : vector<1x128xi32>
    %32 = arith.andi %29, %31 : vector<1x128xi1>
    %c1_i32_9 = arith.constant 1 : i32
    %33 = tpu.dynamic_rotate %22 by %c1_i32_9 dim 1 : vector<16x128xf32>, i32 -> vector<16x128xf32>
    %cst_10 = arith.constant 0.000000e+00 : f32
    %34 = vector.shape_cast %27 : vector<1x128xi1> to vector<1x128xi1>
    %35 = vector.broadcast %34 : vector<1x128xi1> to vector<16x128xi1>
    %36 = vector.broadcast %cst_10 : f32 to vector<16x128xf32>
    %37 = arith.select %35, %33, %36 : vector<16x128xi1>, vector<16x128xf32>
    %c0_11 = arith.constant 0 : index
    %c0_12 = arith.constant 0 : index
    %38 = vector.load %arg9[%c0_11, %c0_12] : memref<48x128xf32, #tpu.memory_space<vmem>>, vector<16x128xf32>
    tpu.vector_store %arg9[%c0_11, %c0_12], %37 {strides = array<i32>} : memref<48x128xf32, #tpu.memory_space<vmem>>, vector<16x128xf32>,
    %c16 = arith.constant 16 : index
    %c0_13 = arith.constant 0 : index
    %39 = vector.load %arg9[%c16, %c0_13] : memref<48x128xf32, #tpu.memory_space<vmem>>, vector<16x128xf32>
    tpu.vector_store %arg9[%c16, %c0_13], %22 {strides = array<i32>} : memref<48x128xf32, #tpu.memory_space<vmem>>, vector<16x128xf32>,
    %c127_i32_14 = arith.constant 127 : i32
    %40 = tpu.dynamic_rotate %22 by %c127_i32_14 dim 1 : vector<16x128xf32>, i32 -> vector<16x128xf32>
    %cst_15 = arith.constant 0.000000e+00 : f32
    %41 = vector.shape_cast %32 : vector<1x128xi1> to vector<1x128xi1>
    %42 = vector.broadcast %41 : vector<1x128xi1> to vector<16x128xi1>
    %43 = vector.broadcast %cst_15 : f32 to vector<16x128xf32>
    %44 = arith.select %42, %40, %43 : vector<16x128xi1>, vector<16x128xf32>
    %c32 = arith.constant 32 : index
    %c0_16 = arith.constant 0 : index
    %45 = vector.load %arg9[%c32, %c0_16] : memref<48x128xf32, #tpu.memory_space<vmem>>, vector<16x128xf32>
    tpu.vector_store %arg9[%c32, %c0_16], %44 {strides = array<i32>} : memref<48x128xf32, #tpu.memory_space<vmem>>, vector<16x128xf32>,
    %c0_17 = arith.constant 0 : index
    %c0_18 = arith.constant 0 : index
    %c0_19 = arith.constant 0 : index
    %46 = vector.load %arg4[%c0_17, %c0_18, %c0_19] : memref<3x32x48xf32, #tpu.memory_space<vmem>>, vector<1x32x48xf32>
    %47 = vector.shape_cast %46 : vector<1x32x48xf32> to vector<32x48xf32>
    %c0_20 = arith.constant 0 : index
    %c0_21 = arith.constant 0 : index
    %48 = vector.load %arg9[%c0_20, %c0_21] : memref<48x128xf32, #tpu.memory_space<vmem>>, vector<48x128xf32>
    %cst_22 = arith.constant dense<0.000000e+00> : vector<32x128xf32>
    %49 = tpu.matmul %47, %48, %cst_22 {dimension_numbers = #tpu.dot_dimension_numbers<[1], [0], [0], [1], [0, 0, 1, 1], [], []>} : vector<32x48xf32>, vector<48x128xf32>, vector<32x128xf32> -> vector<32x128xf32>
    %c0_23 = arith.constant 0 : index
    %c0_24 = arith.constant 0 : index
    %c0_25 = arith.constant 0 : index
    %50 = vector.load %arg5[%c0_23, %c0_24, %c0_25] : memref<3x32x1xf32, #tpu.memory_space<vmem>>, vector<1x32x1xf32>
    %51 = vector.shape_cast %50 : vector<1x32x1xf32> to vector<32x1xf32>
    %52 = vector.broadcast %51 : vector<32x1xf32> to vector<32x128xf32>
    %53 = arith.addf %49, %52 : vector<32x128xf32>
    %54 = vector.extract_strided_slice %53 {offsets = [0, 0], sizes = [16, 128], strides = [1, 1]} : vector<32x128xf32> to vector<16x128xf32>
    %55 = math.tanh %54 : vector<16x128xf32>
    %56 = vector.extract_strided_slice %53 {offsets = [16, 0], sizes = [16, 128], strides = [1, 1]} : vector<32x128xf32> to vector<16x128xf32>
    %57 = arith.negf %56 : vector<16x128xf32>
    %58 = math.exp %57 : vector<16x128xf32>
    %cst_26 = arith.constant 1.000000e+00 : f32
    %59 = vector.broadcast %cst_26 : f32 to vector<16x128xf32>
    %60 = arith.addf %59, %58 : vector<16x128xf32>
    %61 = arith.divf %59, %60 : vector<16x128xf32>
    %62 = arith.mulf %55, %61 : vector<16x128xf32>
    %c0_27 = arith.constant 0 : index
    %c0_28 = arith.constant 0 : index
    %c0_29 = arith.constant 0 : index
    %63 = vector.load %arg6[%c0_27, %c0_28, %c0_29] : memref<3x16x16xf32, #tpu.memory_space<vmem>>, vector<1x16x16xf32>
    %64 = vector.shape_cast %63 : vector<1x16x16xf32> to vector<16x16xf32>
    %cst_30 = arith.constant dense<0.000000e+00> : vector<16x128xf32>
    %65 = tpu.matmul %64, %62, %cst_30 {dimension_numbers = #tpu.dot_dimension_numbers<[1], [0], [0], [1], [0, 0, 1, 1], [], []>} : vector<16x16xf32>, vector<16x128xf32>, vector<16x128xf32> -> vector<16x128xf32>
    %c0_31 = arith.constant 0 : index
    %c0_32 = arith.constant 0 : index
    %c0_33 = arith.constant 0 : index
    %66 = vector.load %arg7[%c0_31, %c0_32, %c0_33] : memref<3x16x1xf32, #tpu.memory_space<vmem>>, vector<1x16x1xf32>
    %67 = vector.shape_cast %66 : vector<1x16x1xf32> to vector<16x1xf32>
    %68 = vector.broadcast %67 : vector<16x1xf32> to vector<16x128xf32>
    %69 = arith.addf %65, %68 : vector<16x128xf32>
    %70 = arith.addf %22, %69 : vector<16x128xf32>
    %c2_i32 = arith.constant 2 : i32
    %71 = vector.broadcast %c2_i32 : i32 to vector<1x128xi32>
    %72 = arith.cmpi sge, %17, %71 : vector<1x128xi32>
    %c130_i32 = arith.constant 130 : i32
    %73 = vector.broadcast %c130_i32 : i32 to vector<1x128xi32>
    %74 = arith.cmpi slt, %17, %73 : vector<1x128xi32>
    %75 = arith.andi %72, %74 : vector<1x128xi1>
    %c-2_i32 = arith.constant -2 : i32
    %76 = vector.broadcast %c-2_i32 : i32 to vector<1x128xi32>
    %77 = arith.cmpi sge, %17, %76 : vector<1x128xi32>
    %c126_i32 = arith.constant 126 : i32
    %78 = vector.broadcast %c126_i32 : i32 to vector<1x128xi32>
    %79 = arith.cmpi slt, %17, %78 : vector<1x128xi32>
    %80 = arith.andi %77, %79 : vector<1x128xi1>
    %c2_i32_34 = arith.constant 2 : i32
    %81 = tpu.dynamic_rotate %69 by %c2_i32_34 dim 1 : vector<16x128xf32>, i32 -> vector<16x128xf32>
    %cst_35 = arith.constant 0.000000e+00 : f32
    %82 = vector.shape_cast %75 : vector<1x128xi1> to vector<1x128xi1>
    %83 = vector.broadcast %82 : vector<1x128xi1> to vector<16x128xi1>
    %84 = vector.broadcast %cst_35 : f32 to vector<16x128xf32>
    %85 = arith.select %83, %81, %84 : vector<16x128xi1>, vector<16x128xf32>
    %c0_36 = arith.constant 0 : index
    %c0_37 = arith.constant 0 : index
    %86 = vector.load %arg9[%c0_36, %c0_37] : memref<48x128xf32, #tpu.memory_space<vmem>>, vector<16x128xf32>
    tpu.vector_store %arg9[%c0_36, %c0_37], %85 {strides = array<i32>} : memref<48x128xf32, #tpu.memory_space<vmem>>, vector<16x128xf32>,
    %c16_38 = arith.constant 16 : index
    %c0_39 = arith.constant 0 : index
    %87 = vector.load %arg9[%c16_38, %c0_39] : memref<48x128xf32, #tpu.memory_space<vmem>>, vector<16x128xf32>
    tpu.vector_store %arg9[%c16_38, %c0_39], %69 {strides = array<i32>} : memref<48x128xf32, #tpu.memory_space<vmem>>, vector<16x128xf32>,
    %c126_i32_40 = arith.constant 126 : i32
    %88 = tpu.dynamic_rotate %69 by %c126_i32_40 dim 1 : vector<16x128xf32>, i32 -> vector<16x128xf32>
    %cst_41 = arith.constant 0.000000e+00 : f32
    %89 = vector.shape_cast %80 : vector<1x128xi1> to vector<1x128xi1>
    %90 = vector.broadcast %89 : vector<1x128xi1> to vector<16x128xi1>
    %91 = vector.broadcast %cst_41 : f32 to vector<16x128xf32>
    %92 = arith.select %90, %88, %91 : vector<16x128xi1>, vector<16x128xf32>
    %c32_42 = arith.constant 32 : index
    %c0_43 = arith.constant 0 : index
    %93 = vector.load %arg9[%c32_42, %c0_43] : memref<48x128xf32, #tpu.memory_space<vmem>>, vector<16x128xf32>
    tpu.vector_store %arg9[%c32_42, %c0_43], %92 {strides = array<i32>} : memref<48x128xf32, #tpu.memory_space<vmem>>, vector<16x128xf32>,
    %c1 = arith.constant 1 : index
    %c0_44 = arith.constant 0 : index
    %c0_45 = arith.constant 0 : index
    %94 = vector.load %arg4[%c1, %c0_44, %c0_45] : memref<3x32x48xf32, #tpu.memory_space<vmem>>, vector<1x32x48xf32>
    %95 = vector.shape_cast %94 : vector<1x32x48xf32> to vector<32x48xf32>
    %c0_46 = arith.constant 0 : index
    %c0_47 = arith.constant 0 : index
    %96 = vector.load %arg9[%c0_46, %c0_47] : memref<48x128xf32, #tpu.memory_space<vmem>>, vector<48x128xf32>
    %cst_48 = arith.constant dense<0.000000e+00> : vector<32x128xf32>
    %97 = tpu.matmul %95, %96, %cst_48 {dimension_numbers = #tpu.dot_dimension_numbers<[1], [0], [0], [1], [0, 0, 1, 1], [], []>} : vector<32x48xf32>, vector<48x128xf32>, vector<32x128xf32> -> vector<32x128xf32>
    %c1_49 = arith.constant 1 : index
    %c0_50 = arith.constant 0 : index
    %c0_51 = arith.constant 0 : index
    %98 = vector.load %arg5[%c1_49, %c0_50, %c0_51] : memref<3x32x1xf32, #tpu.memory_space<vmem>>, vector<1x32x1xf32>
    %99 = vector.shape_cast %98 : vector<1x32x1xf32> to vector<32x1xf32>
    %100 = vector.broadcast %99 : vector<32x1xf32> to vector<32x128xf32>
    %101 = arith.addf %97, %100 : vector<32x128xf32>
    %102 = vector.extract_strided_slice %101 {offsets = [0, 0], sizes = [16, 128], strides = [1, 1]} : vector<32x128xf32> to vector<16x128xf32>
    %103 = math.tanh %102 : vector<16x128xf32>
    %104 = vector.extract_strided_slice %101 {offsets = [16, 0], sizes = [16, 128], strides = [1, 1]} : vector<32x128xf32> to vector<16x128xf32>
    %105 = arith.negf %104 : vector<16x128xf32>
    %106 = math.exp %105 : vector<16x128xf32>
    %cst_52 = arith.constant 1.000000e+00 : f32
    %107 = vector.broadcast %cst_52 : f32 to vector<16x128xf32>
    %108 = arith.addf %107, %106 : vector<16x128xf32>
    %109 = arith.divf %107, %108 : vector<16x128xf32>
    %110 = arith.mulf %103, %109 : vector<16x128xf32>
    %c1_53 = arith.constant 1 : index
    %c0_54 = arith.constant 0 : index
    %c0_55 = arith.constant 0 : index
    %111 = vector.load %arg6[%c1_53, %c0_54, %c0_55] : memref<3x16x16xf32, #tpu.memory_space<vmem>>, vector<1x16x16xf32>
    %112 = vector.shape_cast %111 : vector<1x16x16xf32> to vector<16x16xf32>
    %cst_56 = arith.constant dense<0.000000e+00> : vector<16x128xf32>
    %113 = tpu.matmul %112, %110, %cst_56 {dimension_numbers = #tpu.dot_dimension_numbers<[1], [0], [0], [1], [0, 0, 1, 1], [], []>} : vector<16x16xf32>, vector<16x128xf32>, vector<16x128xf32> -> vector<16x128xf32>
    %c1_57 = arith.constant 1 : index
    %c0_58 = arith.constant 0 : index
    %c0_59 = arith.constant 0 : index
    %114 = vector.load %arg7[%c1_57, %c0_58, %c0_59] : memref<3x16x1xf32, #tpu.memory_space<vmem>>, vector<1x16x1xf32>
    %115 = vector.shape_cast %114 : vector<1x16x1xf32> to vector<16x1xf32>
    %116 = vector.broadcast %115 : vector<16x1xf32> to vector<16x128xf32>
    %117 = arith.addf %113, %116 : vector<16x128xf32>
    %118 = arith.addf %70, %117 : vector<16x128xf32>
    %c4_i32 = arith.constant 4 : i32
    %119 = vector.broadcast %c4_i32 : i32 to vector<1x128xi32>
    %120 = arith.cmpi sge, %17, %119 : vector<1x128xi32>
    %c132_i32 = arith.constant 132 : i32
    %121 = vector.broadcast %c132_i32 : i32 to vector<1x128xi32>
    %122 = arith.cmpi slt, %17, %121 : vector<1x128xi32>
    %123 = arith.andi %120, %122 : vector<1x128xi1>
    %c-4_i32 = arith.constant -4 : i32
    %124 = vector.broadcast %c-4_i32 : i32 to vector<1x128xi32>
    %125 = arith.cmpi sge, %17, %124 : vector<1x128xi32>
    %c124_i32 = arith.constant 124 : i32
    %126 = vector.broadcast %c124_i32 : i32 to vector<1x128xi32>
    %127 = arith.cmpi slt, %17, %126 : vector<1x128xi32>
    %128 = arith.andi %125, %127 : vector<1x128xi1>
    %c4_i32_60 = arith.constant 4 : i32
    %129 = tpu.dynamic_rotate %117 by %c4_i32_60 dim 1 : vector<16x128xf32>, i32 -> vector<16x128xf32>
    %cst_61 = arith.constant 0.000000e+00 : f32
    %130 = vector.shape_cast %123 : vector<1x128xi1> to vector<1x128xi1>
    %131 = vector.broadcast %130 : vector<1x128xi1> to vector<16x128xi1>
    %132 = vector.broadcast %cst_61 : f32 to vector<16x128xf32>
    %133 = arith.select %131, %129, %132 : vector<16x128xi1>, vector<16x128xf32>
    %c0_62 = arith.constant 0 : index
    %c0_63 = arith.constant 0 : index
    %134 = vector.load %arg9[%c0_62, %c0_63] : memref<48x128xf32, #tpu.memory_space<vmem>>, vector<16x128xf32>
    tpu.vector_store %arg9[%c0_62, %c0_63], %133 {strides = array<i32>} : memref<48x128xf32, #tpu.memory_space<vmem>>, vector<16x128xf32>,
    %c16_64 = arith.constant 16 : index
    %c0_65 = arith.constant 0 : index
    %135 = vector.load %arg9[%c16_64, %c0_65] : memref<48x128xf32, #tpu.memory_space<vmem>>, vector<16x128xf32>
    tpu.vector_store %arg9[%c16_64, %c0_65], %117 {strides = array<i32>} : memref<48x128xf32, #tpu.memory_space<vmem>>, vector<16x128xf32>,
    %c124_i32_66 = arith.constant 124 : i32
    %136 = tpu.dynamic_rotate %117 by %c124_i32_66 dim 1 : vector<16x128xf32>, i32 -> vector<16x128xf32>
    %cst_67 = arith.constant 0.000000e+00 : f32
    %137 = vector.shape_cast %128 : vector<1x128xi1> to vector<1x128xi1>
    %138 = vector.broadcast %137 : vector<1x128xi1> to vector<16x128xi1>
    %139 = vector.broadcast %cst_67 : f32 to vector<16x128xf32>
    %140 = arith.select %138, %136, %139 : vector<16x128xi1>, vector<16x128xf32>
    %c32_68 = arith.constant 32 : index
    %c0_69 = arith.constant 0 : index
    %141 = vector.load %arg9[%c32_68, %c0_69] : memref<48x128xf32, #tpu.memory_space<vmem>>, vector<16x128xf32>
    tpu.vector_store %arg9[%c32_68, %c0_69], %140 {strides = array<i32>} : memref<48x128xf32, #tpu.memory_space<vmem>>, vector<16x128xf32>,
    %c2 = arith.constant 2 : index
    %c0_70 = arith.constant 0 : index
    %c0_71 = arith.constant 0 : index
    %142 = vector.load %arg4[%c2, %c0_70, %c0_71] : memref<3x32x48xf32, #tpu.memory_space<vmem>>, vector<1x32x48xf32>
    %143 = vector.shape_cast %142 : vector<1x32x48xf32> to vector<32x48xf32>
    %c0_72 = arith.constant 0 : index
    %c0_73 = arith.constant 0 : index
    %144 = vector.load %arg9[%c0_72, %c0_73] : memref<48x128xf32, #tpu.memory_space<vmem>>, vector<48x128xf32>
    %cst_74 = arith.constant dense<0.000000e+00> : vector<32x128xf32>
    %145 = tpu.matmul %143, %144, %cst_74 {dimension_numbers = #tpu.dot_dimension_numbers<[1], [0], [0], [1], [0, 0, 1, 1], [], []>} : vector<32x48xf32>, vector<48x128xf32>, vector<32x128xf32> -> vector<32x128xf32>
    %c2_75 = arith.constant 2 : index
    %c0_76 = arith.constant 0 : index
    %c0_77 = arith.constant 0 : index
    %146 = vector.load %arg5[%c2_75, %c0_76, %c0_77] : memref<3x32x1xf32, #tpu.memory_space<vmem>>, vector<1x32x1xf32>
    %147 = vector.shape_cast %146 : vector<1x32x1xf32> to vector<32x1xf32>
    %148 = vector.broadcast %147 : vector<32x1xf32> to vector<32x128xf32>
    %149 = arith.addf %145, %148 : vector<32x128xf32>
    %150 = vector.extract_strided_slice %149 {offsets = [0, 0], sizes = [16, 128], strides = [1, 1]} : vector<32x128xf32> to vector<16x128xf32>
    %151 = math.tanh %150 : vector<16x128xf32>
    %152 = vector.extract_strided_slice %149 {offsets = [16, 0], sizes = [16, 128], strides = [1, 1]} : vector<32x128xf32> to vector<16x128xf32>
    %153 = arith.negf %152 : vector<16x128xf32>
    %154 = math.exp %153 : vector<16x128xf32>
    %cst_78 = arith.constant 1.000000e+00 : f32
    %155 = vector.broadcast %cst_78 : f32 to vector<16x128xf32>
    %156 = arith.addf %155, %154 : vector<16x128xf32>
    %157 = arith.divf %155, %156 : vector<16x128xf32>
    %158 = arith.mulf %151, %157 : vector<16x128xf32>
    %c2_79 = arith.constant 2 : index
    %c0_80 = arith.constant 0 : index
    %c0_81 = arith.constant 0 : index
    %159 = vector.load %arg6[%c2_79, %c0_80, %c0_81] : memref<3x16x16xf32, #tpu.memory_space<vmem>>, vector<1x16x16xf32>
    %160 = vector.shape_cast %159 : vector<1x16x16xf32> to vector<16x16xf32>
    %cst_82 = arith.constant dense<0.000000e+00> : vector<16x128xf32>
    %161 = tpu.matmul %160, %158, %cst_82 {dimension_numbers = #tpu.dot_dimension_numbers<[1], [0], [0], [1], [0, 0, 1, 1], [], []>} : vector<16x16xf32>, vector<16x128xf32>, vector<16x128xf32> -> vector<16x128xf32>
    %c2_83 = arith.constant 2 : index
    %c0_84 = arith.constant 0 : index
    %c0_85 = arith.constant 0 : index
    %162 = vector.load %arg7[%c2_83, %c0_84, %c0_85] : memref<3x16x1xf32, #tpu.memory_space<vmem>>, vector<1x16x1xf32>
    %163 = vector.shape_cast %162 : vector<1x16x1xf32> to vector<16x1xf32>
    %164 = vector.broadcast %163 : vector<16x1xf32> to vector<16x128xf32>
    %165 = arith.addf %161, %164 : vector<16x128xf32>
    %166 = arith.addf %118, %165 : vector<16x128xf32>
    %c0_86 = arith.constant 0 : index
    %c0_87 = arith.constant 0 : index
    %167 = vector.load %arg8[%c0_86, %c0_87] : memref<16x128xf32, #tpu.memory_space<vmem>>, vector<16x128xf32>
    tpu.vector_store %arg8[%c0_86, %c0_87], %166 {strides = array<i32>} : memref<16x128xf32, #tpu.memory_space<vmem>>, vector<16x128xf32>,
    return
  }
  func.func @transform_0(%arg0: i32) -> (i32, i32) {
    %c0_i32 = arith.constant 0 : i32
    %c0_i32_0 = arith.constant 0 : i32
    return %c0_i32, %arg0 : i32, i32
  }
  func.func @transform_1(%arg0: i32) -> (i32, i32) {
    %c0_i32 = arith.constant 0 : i32
    %c0_i32_0 = arith.constant 0 : i32
    %c0_i32_1 = arith.constant 0 : i32
    return %c0_i32, %c0_i32_0 : i32, i32
  }
  func.func @transform_2(%arg0: i32) -> (i32, i32) {
    %c0_i32 = arith.constant 0 : i32
    %c0_i32_0 = arith.constant 0 : i32
    %c0_i32_1 = arith.constant 0 : i32
    return %c0_i32, %c0_i32_0 : i32, i32
  }
  func.func @transform_3(%arg0: i32) -> (i32, i32, i32) {
    %c0_i32 = arith.constant 0 : i32
    %c0_i32_0 = arith.constant 0 : i32
    %c0_i32_1 = arith.constant 0 : i32
    %c0_i32_2 = arith.constant 0 : i32
    return %c0_i32, %c0_i32_0, %c0_i32_1 : i32, i32, i32
  }
  func.func @transform_4(%arg0: i32) -> (i32, i32, i32) {
    %c0_i32 = arith.constant 0 : i32
    %c0_i32_0 = arith.constant 0 : i32
    %c0_i32_1 = arith.constant 0 : i32
    %c0_i32_2 = arith.constant 0 : i32
    return %c0_i32, %c0_i32_0, %c0_i32_1 : i32, i32, i32
  }
  func.func @transform_5(%arg0: i32) -> (i32, i32, i32) {
    %c0_i32 = arith.constant 0 : i32
    %c0_i32_0 = arith.constant 0 : i32
    %c0_i32_1 = arith.constant 0 : i32
    %c0_i32_2 = arith.constant 0 : i32
    return %c0_i32, %c0_i32_0, %c0_i32_1 : i32, i32, i32
  }
  func.func @transform_6(%arg0: i32) -> (i32, i32, i32) {
    %c0_i32 = arith.constant 0 : i32
    %c0_i32_0 = arith.constant 0 : i32
    %c0_i32_1 = arith.constant 0 : i32
    %c0_i32_2 = arith.constant 0 : i32
    return %c0_i32, %c0_i32_0, %c0_i32_1 : i32, i32, i32
  }
  func.func @transform_7(%arg0: i32) -> (i32, i32) {
    %c0_i32 = arith.constant 0 : i32
    %c0_i32_0 = arith.constant 0 : i32
    return %c0_i32, %arg0 : i32, i32
  }
}

</mosaic_0001>

<llo_original>
// kernel: tpu_custom_call.1
$region0: #{tpu_custom_call.1}
  #allocation0 [shape = 'u32[]', space=smem, size = 0x4, offset = 0x4, fixed_abs, tag = 'smem constant byte address 0x4 - core index']
  #allocation1 [shape = 'u32[144,128]{1,0:T(1,128)}', space=vmem, size = 0x12000, scoped, tag = 'internal scratch']
  #allocation2 [shape = 'f32[48,128]{1,0:T(8,128)}', space=vmem, size = 0x6000, scoped, tag = 'scratch operand']
  %s0 = inlined_call_operand.vmem [shape: f32[4,256], index: 0, kind: input, shape index: {}]
  %s1 = inlined_call_operand.vmem [shape: f32[16,4], index: 1, kind: input, shape index: {}]
  %s2 = inlined_call_operand.vmem [shape: f32[16,1], index: 2, kind: input, shape index: {}]
  %s3 = inlined_call_operand.vmem [shape: f32[3,32,48], index: 3, kind: input, shape index: {}]
  %s4 = inlined_call_operand.vmem [shape: f32[3,32,1], index: 4, kind: input, shape index: {}]
  %s5 = inlined_call_operand.vmem [shape: f32[3,16,16], index: 5, kind: input, shape index: {}]
  %s6 = inlined_call_operand.vmem [shape: f32[3,16,1], index: 6, kind: input, shape index: {}]
  %s7 = inlined_call_operand.hbm [shape: f32[16,256], index: 7, kind: output, shape index: {}]
  %s8 = sld [smem:[#allocation0]]
  $region61: #{tpu_custom_call.1} parent=0
    _
  %s10 = ssub.s32 1, %s8
  %s11 = scalar_select 0, %s10, %s8
  $region1: #{tpu_custom_call.1} parent=0
    #allocation3 [shape = 'u8[16384]{0}', space=vmem, size = 0x4000, scoped, tag = 'output window, operand 0']
    #allocation4 [shape = 's32[2]{0}', space=sflag, size = 0x8, scoped, tag = 'scoped memory for tpu_custom_call.1']
    %12 = vsyncpa [#allocation4], 0
    %s13 = scalar_lea.sflag [#allocation4], 1
    %14 = vsyncpa %s13, 0
    loop: start=0, step=1, limit=4
    $region2: #{tpu_custom_call.1} parent=1 // loop_pre_header
      _
    $region3: #{tpu_custom_call.1} parent=1 // loop_header
      %s16 = sphi 0, %s20
      %p17 = scmp.ge.s32.totalorder %s16, 4
      %s26 = sphi 0, %s28
      %s29 = sphi 0, %s26
      %s30 = sphi 0, %s29
      %s46 = sphi 0, %s30
      %s50 = sphi 0, %s50
      %s52 = sphi 0, %s50
      %s53 = sphi 0, %s52
      %s67 = sphi 0, %s53
      %s71 = sphi 0, %s71
      %s73 = sphi 0, %s71
      %s74 = sphi 0, %s73
      %s88 = sphi 0, %s74
      %s92 = sphi 0, %s92
      %s94 = sphi 0, %s92
      %s95 = sphi 0, %s94
      %s109 = sphi 0, %s95
      %s113 = sphi 0, %s113
      %s115 = sphi 0, %s113
      %s116 = sphi 0, %s115
      %s130 = sphi 0, %s116
      %s134 = sphi 0, %s134
      %s136 = sphi 0, %s134
      %s137 = sphi 0, %s136
      %s151 = sphi 0, %s137
      %s155 = sphi 0, %s155
      %s157 = sphi 0, %s155
      %s158 = sphi 0, %s157
      %s172 = sphi 0, %s158
      %s178 = sphi 0, %s180
      %s181 = sphi 0, %s178
      %s182 = sphi 0, %s181
      %s198 = sphi 0, %s182
    $region4: #{tpu_custom_call.1} parent=1 // loop_header_branch
      %19 = sbr.rel (%p17) target = $region8
    $region5: #{tpu_custom_call.1} parent=1 // loop_body
      %s21 = ssub.s32 %s16, 1
      %s22 = ssub.s32 %s16, 2
      %s23 = sadd.s32 %s16, 1
      %s24 = ssub.s32 %s16, %s23
      %p25 = scmp.eq.s32.totalorder %s24, 0
      %s27 = sadd.s32 %s26, 1
      %s28 = scalar_select %p25, %s26, %s27
      %p31 = pneg %p25
      %p32 = scmp.eq.s32.totalorder %s16, 1
      %p33 = por %p31, %p32
      %p34 = scmp.ne.s32.totalorder %s26, %s29
      %p35 = scmp.eq.s32.totalorder %s16, 0
      %p36 = por %p34, %p35
      %p37 = scmp.ne.s32.totalorder %s26, %s29
      %p38 = scmp.eq.s32.totalorder %s21, 1
      %p39 = por %p37, %p38
      %p40 = scmp.ne.s32.totalorder %s29, %s30
      %p41 = scmp.eq.s32.totalorder %s21, 0
      %p42 = por %p40, %p41
      %p43 = scmp.ne.s32.totalorder %s29, %s30
      %p44 = scmp.eq.s32.totalorder %s22, 1
      %p45 = por %p43, %p44
      %p47 = scmp.ne.s32.totalorder %s30, %s46
      %p48 = scmp.eq.s32.totalorder %s22, 0
      %p49 = por %p47, %p48
      %s51 = sadd.s32 %s50, 1
      %p54 = scmp.eq.s32.totalorder %s16, 1
      %p55 = scmp.ne.s32.totalorder %s50, %s52
      %p56 = scmp.eq.s32.totalorder %s16, 0
      %p57 = por %p55, %p56
      %p58 = scmp.ne.s32.totalorder %s50, %s52
      %p59 = scmp.eq.s32.totalorder %s21, 1
      %p60 = por %p58, %p59
      %p61 = scmp.ne.s32.totalorder %s52, %s53
      %p62 = scmp.eq.s32.totalorder %s21, 0
      %p63 = por %p61, %p62
      %p64 = scmp.ne.s32.totalorder %s52, %s53
      %p65 = scmp.eq.s32.totalorder %s22, 1
      %p66 = por %p64, %p65
      %p68 = scmp.ne.s32.totalorder %s53, %s67
      %p69 = scmp.eq.s32.totalorder %s22, 0
      %p70 = por %p68, %p69
      %s72 = sadd.s32 %s71, 1
      %p75 = scmp.eq.s32.totalorder %s16, 1
      %p76 = scmp.ne.s32.totalorder %s71, %s73
      %p77 = scmp.eq.s32.totalorder %s16, 0
      %p78 = por %p76, %p77
      %p79 = scmp.ne.s32.totalorder %s71, %s73
      %p80 = scmp.eq.s32.totalorder %s21, 1
      %p81 = por %p79, %p80
      %p82 = scmp.ne.s32.totalorder %s73, %s74
      %p83 = scmp.eq.s32.totalorder %s21, 0
      %p84 = por %p82, %p83
      %p85 = scmp.ne.s32.totalorder %s73, %s74
      %p86 = scmp.eq.s32.totalorder %s22, 1
      %p87 = por %p85, %p86
      %p89 = scmp.ne.s32.totalorder %s74, %s88
      %p90 = scmp.eq.s32.totalorder %s22, 0
      %p91 = por %p89, %p90
      %s93 = sadd.s32 %s92, 1
      %p96 = scmp.eq.s32.totalorder %s16, 1
      %p97 = scmp.ne.s32.totalorder %s92, %s94
      %p98 = scmp.eq.s32.totalorder %s16, 0
      %p99 = por %p97, %p98
      %p100 = scmp.ne.s32.totalorder %s92, %s94
      %p101 = scmp.eq.s32.totalorder %s21, 1
      %p102 = por %p100, %p101
      %p103 = scmp.ne.s32.totalorder %s94, %s95
      %p104 = scmp.eq.s32.totalorder %s21, 0
      %p105 = por %p103, %p104
      %p106 = scmp.ne.s32.totalorder %s94, %s95
      %p107 = scmp.eq.s32.totalorder %s22, 1
      %p108 = por %p106, %p107
      %p110 = scmp.ne.s32.totalorder %s95, %s109
      %p111 = scmp.eq.s32.totalorder %s22, 0
      %p112 = por %p110, %p111
      %s114 = sadd.s32 %s113, 1
      %p117 = scmp.eq.s32.totalorder %s16, 1
      %p118 = scmp.ne.s32.totalorder %s113, %s115
      %p119 = scmp.eq.s32.totalorder %s16, 0
      %p120 = por %p118, %p119
      %p121 = scmp.ne.s32.totalorder %s113, %s115
      %p122 = scmp.eq.s32.totalorder %s21, 1
      %p123 = por %p121, %p122
      %p124 = scmp.ne.s32.totalorder %s115, %s116
      %p125 = scmp.eq.s32.totalorder %s21, 0
      %p126 = por %p124, %p125
      %p127 = scmp.ne.s32.totalorder %s115, %s116
      %p128 = scmp.eq.s32.totalorder %s22, 1
      %p129 = por %p127, %p128
      %p131 = scmp.ne.s32.totalorder %s116, %s130
      %p132 = scmp.eq.s32.totalorder %s22, 0
      %p133 = por %p131, %p132
      %s135 = sadd.s32 %s134, 1
      %p138 = scmp.eq.s32.totalorder %s16, 1
      %p139 = scmp.ne.s32.totalorder %s134, %s136
      %p140 = scmp.eq.s32.totalorder %s16, 0
      %p141 = por %p139, %p140
      %p142 = scmp.ne.s32.totalorder %s134, %s136
      %p143 = scmp.eq.s32.totalorder %s21, 1
      %p144 = por %p142, %p143
      %p145 = scmp.ne.s32.totalorder %s136, %s137
      %p146 = scmp.eq.s32.totalorder %s21, 0
      %p147 = por %p145, %p146
      %p148 = scmp.ne.s32.totalorder %s136, %s137
      %p149 = scmp.eq.s32.totalorder %s22, 1
      %p150 = por %p148, %p149
      %p152 = scmp.ne.s32.totalorder %s137, %s151
      %p153 = scmp.eq.s32.totalorder %s22, 0
      %p154 = por %p152, %p153
      %s156 = sadd.s32 %s155, 1
      %p159 = scmp.eq.s32.totalorder %s16, 1
      %p160 = scmp.ne.s32.totalorder %s155, %s157
      %p161 = scmp.eq.s32.totalorder %s16, 0
      %p162 = por %p160, %p161
      %p163 = scmp.ne.s32.totalorder %s155, %s157
      %p164 = scmp.eq.s32.totalorder %s21, 1
      %p165 = por %p163, %p164
      %p166 = scmp.ne.s32.totalorder %s157, %s158
      %p167 = scmp.eq.s32.totalorder %s21, 0
      %p168 = por %p166, %p167
      %p169 = scmp.ne.s32.totalorder %s157, %s158
      %p170 = scmp.eq.s32.totalorder %s22, 1
      %p171 = por %p169, %p170
      %p173 = scmp.ne.s32.totalorder %s158, %s172
      %p174 = scmp.eq.s32.totalorder %s22, 0
      %p175 = por %p173, %p174
      %s176 = ssub.s32 %s16, %s23
      %p177 = scmp.eq.s32.totalorder %s176, 0
      %s179 = sadd.s32 %s178, 1
      %s180 = scalar_select %p177, %s178, %s179
      %p183 = pneg %p177
      %p184 = scmp.eq.s32.totalorder %s16, 1
      %p185 = por %p183, %p184
      %p186 = scmp.ne.s32.totalorder %s178, %s181
      %p187 = scmp.eq.s32.totalorder %s16, 0
      %p188 = por %p186, %p187
      %p189 = scmp.ne.s32.totalorder %s178, %s181
      %p190 = scmp.eq.s32.totalorder %s21, 1
      %p191 = por %p189, %p190
      %p192 = scmp.ne.s32.totalorder %s181, %s182
      %p193 = scmp.eq.s32.totalorder %s21, 0
      %p194 = por %p192, %p193
      %p195 = scmp.ne.s32.totalorder %s181, %s182
      %p196 = scmp.eq.s32.totalorder %s22, 1
      %p197 = por %p195, %p196
      %p199 = scmp.ne.s32.totalorder %s182, %s198
      %p200 = scmp.eq.s32.totalorder %s22, 0
      %p201 = por %p199, %p200
      %p202 = scmp.le.s32.totalorder 1, %s16
      %p203 = scmp.lt.s32.totalorder %s16, 3
      %p204 = pnand %p202, %p203
      %p205 = pneg %p204
      // Predicated region
      $region9: #{tpu_custom_call.1} parent=5 // pred_check
        _
      $region10: #{tpu_custom_call.1} parent=5 // pred_check_branch
        %207 = sbr.rel (%p204) target = $region12
      $region11: #{tpu_custom_call.1} parent=5 // pred_region
        %s208 = ssub.s32 %s16, 1
        // Predicated region
        $region13: #{tpu_custom_call.1} parent=11 // pred_check
          %p209 = pneg %p63
        $region14: #{tpu_custom_call.1} parent=11 // pred_check_branch
          %211 = sbr.rel (%p209) target = $region16
        $region15: #{tpu_custom_call.1} parent=11 // pred_region
          _
        $region16: #{tpu_custom_call.1} parent=11 // pred_fallthru
          _
        // Predicated region
        $region17: #{tpu_custom_call.1} parent=11 // pred_check
          %p212 = pneg %p84
        $region18: #{tpu_custom_call.1} parent=11 // pred_check_branch
          %214 = sbr.rel (%p212) target = $region20
        $region19: #{tpu_custom_call.1} parent=11 // pred_region
          _
        $region20: #{tpu_custom_call.1} parent=11 // pred_fallthru
          _
        // Predicated region
        $region21: #{tpu_custom_call.1} parent=11 // pred_check
          %p215 = pneg %p105
        $region22: #{tpu_custom_call.1} parent=11 // pred_check_branch
          %217 = sbr.rel (%p215) target = $region24
        $region23: #{tpu_custom_call.1} parent=11 // pred_region
          _
        $region24: #{tpu_custom_call.1} parent=11 // pred_fallthru
          _
        // Predicated region
        $region25: #{tpu_custom_call.1} parent=11 // pred_check
          %p218 = pneg %p126
        $region26: #{tpu_custom_call.1} parent=11 // pred_check_branch
          %220 = sbr.rel (%p218) target = $region28
        $region27: #{tpu_custom_call.1} parent=11 // pred_region
          _
        $region28: #{tpu_custom_call.1} parent=11 // pred_fallthru
          _
        // Predicated region
        $region29: #{tpu_custom_call.1} parent=11 // pred_check
          %p221 = pneg %p147
        $region30: #{tpu_custom_call.1} parent=11 // pred_check_branch
          %223 = sbr.rel (%p221) target = $region32
        $region31: #{tpu_custom_call.1} parent=11 // pred_region
          _
        $region32: #{tpu_custom_call.1} parent=11 // pred_fallthru
          _
        // Predicated region
        $region33: #{tpu_custom_call.1} parent=11 // pred_check
          %p224 = pneg %p168
        $region34: #{tpu_custom_call.1} parent=11 // pred_check_branch
          %226 = sbr.rel (%p224) target = $region36
        $region35: #{tpu_custom_call.1} parent=11 // pred_region
          _
        $region36: #{tpu_custom_call.1} parent=11 // pred_fallthru
          _
      $region12: #{tpu_custom_call.1} parent=5 // pred_fallthru
        _
      %p227 = scmp.lt.s32.totalorder %s16, 2
      // Predicated region
      $region37: #{tpu_custom_call.1} parent=5 // pred_check
        %p228 = pneg %p227
      $region38: #{tpu_custom_call.1} parent=5 // pred_check_branch
        %230 = sbr.rel (%p228) target = $region40
      $region39: #{tpu_custom_call.1} parent=5 // pred_region
        // Predicated region
        $region41: #{tpu_custom_call.1} parent=39 // pred_check
          %p231 = pneg %p36
        $region42: #{tpu_custom_call.1} parent=39 // pred_check_branch
          %233 = sbr.rel (%p231) target = $region44
        $region43: #{tpu_custom_call.1} parent=39 // pred_region
          %p234 = scmp.lt.s32.totalorder %s16, 1
          %s235 = scalar_select %p234, %s16, 1
          %s236 = smul.addr %s235, 4
          %s237 = scalar_lea.vmem %s0, %s236
        $region44: #{tpu_custom_call.1} parent=39 // pred_fallthru
          _
      $region40: #{tpu_custom_call.1} parent=5 // pred_fallthru
        _
      %p238 = scmp.le.s32.totalorder 1, %s16
      %p239 = scmp.lt.s32.totalorder %s16, 3
      %p240 = pnand %p238, %p239
      %p241 = pneg %p240
      // Predicated region
      $region45: #{tpu_custom_call.1} parent=5 // pred_check
        _
      $region46: #{tpu_custom_call.1} parent=5 // pred_check_branch
        %243 = sbr.rel (%p240) target = $region48
      $region47: #{tpu_custom_call.1} parent=5 // pred_region
        %s244 = ssub.s32 %s16, 1
        %p245 = scmp.lt.s32.totalorder %s21, 1
        %s246 = scalar_select %p245, %s21, 1
        %s247 = smul.addr %s246, 4
        %s248 = scalar_lea.vmem %s0, %s247
        %p249 = pneg %p42
        %p250 = pneg %p39
        %p251 = pneg %p63
        %p252 = pneg %p60
        %p253 = pneg %p84
        %p254 = pneg %p81
        %p255 = pneg %p105
        %p256 = pneg %p102
        %p257 = pneg %p126
        %p258 = pneg %p123
        %p259 = pneg %p147
        %p260 = pneg %p144
        %p261 = pneg %p168
        %p262 = pneg %p165
        %p263 = pneg %p194
        %p264 = pneg %p191
        %s265 = sand.u32 %s181, 1
        %s266 = scalar_lea.sflag [#allocation4], %s265
        %s267 = sand.u32 %s181, 1
        %s268 = smul.addr %s267, 16
        %s269 = scalar_lea.vmem [#allocation3], %s268
        %p270 = scmp.lt.s32.totalorder %s21, 1
        %s271 = scalar_select %p270, %s21, 1
        %s272 = smul.addr %s271, 4
        %s273 = scalar_lea.vmem %s0, %s272
        %v274 = vld [vmem:[%s273] sm:$0xf]
        %v275 = vlaneseq
        %v276 = vand.u32 %v275, 127
        %vm277 = vcmp.lt.s32.totalorder %v276, 0
        %v278 = vsub.s32 0, %v276
        %v279 = vsel %vm277, %v278, %v276
        %v280 = vshrl.u32 %v279, 7
        %v281 = vand.u32 %v279, 127
        %v282 = vsub.s32 0, %v281
        %v283 = vsel %vm277, %v282, %v281
        %vm284 = vcmp.ne.s32.totalorder %v283, 0
        %vm285 = vcmp.lt.s32.totalorder %v283, 0
        %vm286 = vmand %vm285, %vm284
        %v287 = vadd.s32 %v283, 128
        %v288 = vsel %vm286, %v287, %v283
        %v289 = vld [vmem:[%s1] sm:$0xff]
        %v290 = vld [vmem:[%s1 + $0x8] sm:$0xff]
        %v291 = vld [vmem:[%s2] sm:$0xff]
        %v292 = vld [vmem:[%s2 + $0x8] sm:$0xff]
        %294 = vset.pattern.permute.xlu0 0
        %295 = vperm.xlu0 %294, %v291
        %v296 = vpop.permute.xlu0 %295
        %299 = vset.pattern.permute.xlu0 0
        %300 = vperm.xlu0 %299, %v292
        %v301 = vpop.permute.xlu0 %300
        %vm303 = vcmask 31744
        %v305 = vsel %vm303, %v289, 0
        %v308 = vsel %vm303, %v290, 0
        %vm310 = vcmask 1043456
        %v312 = vsel %vm310, %v274, 0
        %314 = vmatprep.subr.mxu0 0.0
        %315 = vmatpush1.msra.mxu0 %v312
        %316 = vmatprep.subr.mxu0 0.0
        %317 = vmatpush1.msra.mxu0 0.0
        %318 = vmatprep.subr.mxu0 0.0
        %319 = vmatpush1.msra.mxu0 0.0
        %320 = vmatprep.subr.mxu0 0.0
        %321 = vmatpush1.msra.mxu0 0.0
        %322 = vmatprep.subr.mxu0 0.0
        %323 = vmatpush1.msra.mxu0 0.0
        %324 = vmatprep.subr.mxu0 0.0
        %325 = vmatpush1.msra.mxu0 0.0
        %326 = vmatprep.subr.mxu0 0.0
        %327 = vmatpush1.msra.mxu0 0.0
        %328 = vmatprep.subr.mxu0 0.0
        %329 = vmatpush1.msra.mxu0 0.0
        %330 = vmatprep.subr.mxu0 0.0
        %331 = vmatpush1.msra.mxu0 0.0
        %332 = vmatprep.subr.mxu0 0.0
        %333 = vmatpush1.msra.mxu0 0.0
        %334 = vmatprep.subr.mxu0 0.0
        %335 = vmatpush1.msra.mxu0 0.0
        %336 = vmatprep.subr.mxu0 0.0
        %337 = vmatpush1.msra.mxu0 0.0
        %338 = vmatprep.subr.mxu0 0.0
        %339 = vmatpush1.msra.mxu0 0.0
        %340 = vmatprep.subr.mxu0 0.0
        %341 = vmatpush1.msra.mxu0 0.0
        %342 = vmatprep.subr.mxu0 0.0
        %343 = vmatpush1.msra.mxu0 0.0
        %344 = vmatprep.subr.mxu0 0.0
        %345 = vmatpush1.msra.mxu0 0.0
        %346 = vmatprep.subr.mxu0 0.0
        %347 = vmatpush1.msra.mxu0 0.0
        %348 = vmatprep.subr.mxu0 0.0
        %349 = vmatpush1.msra.mxu0 0.0
        %350 = vmatprep.subr.mxu0 0.0
        %351 = vmatpush1.msra.mxu0 0.0
        %352 = vmatprep.subr.mxu0 0.0
        %353 = vmatpush1.msra.mxu0 0.0
        %354 = vmatprep.subr.mxu0 0.0
        %355 = vmatpush1.msra.mxu0 0.0
        %356 = vmatprep.subr.mxu0 0.0
        %357 = vmatpush1.msra.mxu0 0.0
        %358 = vmatprep.subr.mxu0 0.0
        %359 = vmatpush1.msra.mxu0 0.0
        %360 = vmatprep.subr.mxu0 0.0
        %361 = vmatpush1.msra.mxu0 0.0
        %362 = vmatprep.subr.mxu0 0.0
        %363 = vmatpush1.msra.mxu0 0.0
        %364 = vmatprep.subr.mxu0 0.0
        %365 = vmatpush1.msra.mxu0 0.0
        %366 = vmatprep.subr.mxu0 0.0
        %367 = vmatpush1.msra.mxu0 0.0
        %368 = vmatprep.subr.mxu0 0.0
        %369 = vmatpush1.msra.mxu0 0.0
        %370 = vmatprep.subr.mxu0 0.0
        %371 = vmatpush1.msra.mxu0 0.0
        %372 = vmatprep.subr.mxu0 0.0
        %373 = vmatpush1.msra.mxu0 0.0
        %374 = vmatprep.subr.mxu0 0.0
        %375 = vmatpush1.msra.mxu0 0.0
        %376 = vmatprep.subr.mxu0 0.0
        %377 = vmatpush1.msra.mxu0 0.0
        %378 = vmatprep.mubr.f32.mxu0 0.0
        %379 = vmatmul.mubr.f32.gmra.mrb[0].mxu0 %v305
        %v380 = vpop.f32.mrb[0].mxu0
        %v381 = vadd.f32 %v296, %v380
        %v382 = vpop.f32.mrb[0].mxu0
        %383 = vmatprep.mubr.f32.mxu0 0.0
        %384 = vmatmul.mubr.f32.gmra.mrb[0].mxu0 %v308
        %v385 = vpop.f32.mrb[0].mxu0
        %v386 = vadd.f32 %v301, %v385
        %v387 = vpop.f32.mrb[0].mxu0
        %388 = vdwg.mxu0
        %vm389 = vcmp.ge.s32.totalorder %v288, 1
        %vm390 = vcmp.lt.s32.totalorder %v288, 129
        %vm391 = vmand %vm389, %vm390
        %vm392 = vcmp.ge.s32.totalorder %v288, 4294967295
        %vm393 = vcmp.lt.s32.totalorder %v288, 127
        %vm394 = vmand %vm392, %vm393
        %395 = vrot.lane.b32.xlu0 %v381, 1
        %v396 = vpop.permute.xlu0 %395
        %397 = vrot.lane.b32.xlu0 %v386, 1
        %v398 = vpop.permute.xlu0 %397
        %v399 = vsel %vm391, 1, 0
        %vm400 = vcmp.eq.s32.totalorder %v399, 1
        %v401 = vsel %vm400, %v396, 0.0
        %v402 = vsel %vm400, %v398, 0.0
        %403 = vst [vmem:[#allocation2] sm:$0xff] %v401
        %404 = vst [vmem:[#allocation2 + $0x8] sm:$0xff] %v402
        %405 = vst [vmem:[#allocation2 + $0x10] sm:$0xff] %v381
        %406 = vst [vmem:[#allocation2 + $0x18] sm:$0xff] %v386
        %407 = vrot.lane.b32.xlu0 %v381, 127
        %v408 = vpop.permute.xlu0 %407
        %409 = vrot.lane.b32.xlu0 %v386, 127
        %v410 = vpop.permute.xlu0 %409
        %v411 = vsel %vm394, 1, 0
        %vm412 = vcmp.eq.s32.totalorder %v411, 1
        %v413 = vsel %vm412, %v408, 0.0
        %v414 = vsel %vm412, %v410, 0.0
        %415 = vst [vmem:[#allocation2 + $0x20] sm:$0xff] %v413
        %416 = vst [vmem:[#allocation2 + $0x28] sm:$0xff] %v414
        %v417 = vld [vmem:[%s3] sm:$0xff]
        %v418 = vld [vmem:[%s3 + $0x8] sm:$0xff]
        %v419 = vld [vmem:[%s3 + $0x10] sm:$0xff]
        %v420 = vld [vmem:[%s3 + $0x18] sm:$0xff]
        %v421 = vld [vmem:[#allocation2] sm:$0xff]
        %v422 = vld [vmem:[#allocation2 + $0x8] sm:$0xff]
        %v423 = vld [vmem:[#allocation2 + $0x10] sm:$0xff]
        %v424 = vld [vmem:[#allocation2 + $0x18] sm:$0xff]
        %v425 = vld [vmem:[#allocation2 + $0x20] sm:$0xff]
        %v426 = vld [vmem:[#allocation2 + $0x28] sm:$0xff]
        %v427 = vld [vmem:[%s4] sm:$0xff]
        %v428 = vld [vmem:[%s4 + $0x8] sm:$0xff]
        %v429 = vld [vmem:[%s4 + $0x10] sm:$0xff]
        %v430 = vld [vmem:[%s4 + $0x18] sm:$0xff]
        %432 = vset.pattern.permute.xlu0 0
        %433 = vperm.xlu0 %432, %v427
        %v434 = vpop.permute.xlu0 %433
        %437 = vset.pattern.permute.xlu0 0
        %438 = vperm.xlu0 %437, %v428
        %v439 = vpop.permute.xlu0 %438
        %442 = vset.pattern.permute.xlu0 0
        %443 = vperm.xlu0 %442, %v429
        %v444 = vpop.permute.xlu0 %443
        %447 = vset.pattern.permute.xlu0 0
        %448 = vperm.xlu0 %447, %v430
        %v449 = vpop.permute.xlu0 %448
        %vm451 = vcmask 392192
        %v453 = vsel %vm451, %v417, 0
        %v456 = vsel %vm451, %v418, 0
        %v459 = vsel %vm451, %v419, 0
        %v462 = vsel %vm451, %v420, 0
        %464 = vmatprep.subr.mxu0 0.0
        %465 = vmatpush1.msra.mxu0 %v421
        %466 = vmatprep.subr.mxu0 0.0
        %467 = vmatpush1.msra.mxu0 %v422
        %468 = vmatprep.subr.mxu0 0.0
        %469 = vmatpush1.msra.mxu0 %v423
        %470 = vmatprep.subr.mxu0 0.0
        %471 = vmatpush1.msra.mxu0 %v424
        %472 = vmatprep.subr.mxu0 0.0
        %473 = vmatpush1.msra.mxu0 %v425
        %474 = vmatprep.subr.mxu0 0.0
        %475 = vmatpush1.msra.mxu0 %v426
        %476 = vmatprep.subr.mxu0 0.0
        %477 = vmatpush1.msra.mxu0 0.0
        %478 = vmatprep.subr.mxu0 0.0
        %479 = vmatpush1.msra.mxu0 0.0
        %480 = vmatprep.subr.mxu0 0.0
        %481 = vmatpush1.msra.mxu0 0.0
        %482 = vmatprep.subr.mxu0 0.0
        %483 = vmatpush1.msra.mxu0 0.0
        %484 = vmatprep.subr.mxu0 0.0
        %485 = vmatpush1.msra.mxu0 0.0
        %486 = vmatprep.subr.mxu0 0.0
        %487 = vmatpush1.msra.mxu0 0.0
        %488 = vmatprep.subr.mxu0 0.0
        %489 = vmatpush1.msra.mxu0 0.0
        %490 = vmatprep.subr.mxu0 0.0
        %491 = vmatpush1.msra.mxu0 0.0
        %492 = vmatprep.subr.mxu0 0.0
        %493 = vmatpush1.msra.mxu0 0.0
        %494 = vmatprep.subr.mxu0 0.0
        %495 = vmatpush1.msra.mxu0 0.0
        %496 = vmatprep.subr.mxu0 0.0
        %497 = vmatpush1.msra.mxu0 0.0
        %498 = vmatprep.subr.mxu0 0.0
        %499 = vmatpush1.msra.mxu0 0.0
        %500 = vmatprep.subr.mxu0 0.0
        %501 = vmatpush1.msra.mxu0 0.0
        %502 = vmatprep.subr.mxu0 0.0
        %503 = vmatpush1.msra.mxu0 0.0
        %504 = vmatprep.subr.mxu0 0.0
        %505 = vmatpush1.msra.mxu0 0.0
        %506 = vmatprep.subr.mxu0 0.0
        %507 = vmatpush1.msra.mxu0 0.0
        %508 = vmatprep.subr.mxu0 0.0
        %509 = vmatpush1.msra.mxu0 0.0
        %510 = vmatprep.subr.mxu0 0.0
        %511 = vmatpush1.msra.mxu0 0.0
        %512 = vmatprep.subr.mxu0 0.0
        %513 = vmatpush1.msra.mxu0 0.0
        %514 = vmatprep.subr.mxu0 0.0
        %515 = vmatpush1.msra.mxu0 0.0
        %516 = vmatprep.subr.mxu0 0.0
        %517 = vmatpush1.msra.mxu0 0.0
        %518 = vmatprep.subr.mxu0 0.0
        %519 = vmatpush1.msra.mxu0 0.0
        %520 = vmatprep.subr.mxu0 0.0
        %521 = vmatpush1.msra.mxu0 0.0
        %522 = vmatprep.subr.mxu0 0.0
        %523 = vmatpush1.msra.mxu0 0.0
        %524 = vmatprep.subr.mxu0 0.0
        %525 = vmatpush1.msra.mxu0 0.0
        %526 = vmatprep.subr.mxu0 0.0
        %527 = vmatpush1.msra.mxu0 0.0
        %528 = vmatprep.mubr.f32.mxu0 0.0
        %529 = vmatmul.mubr.f32.gmra.mrb[0].mxu0 %v453
        %v530 = vpop.f32.mrb[0].mxu0
        %v531 = vadd.f32 %v434, %v530
        %v532 = vpop.f32.mrb[0].mxu0
        %533 = vmatprep.mubr.f32.mxu0 0.0
        %534 = vmatmul.mubr.f32.gmra.mrb[0].mxu0 %v456
        %v535 = vpop.f32.mrb[0].mxu0
        %v536 = vadd.f32 %v439, %v535
        %v537 = vpop.f32.mrb[0].mxu0
        %538 = vmatprep.mubr.f32.mxu0 0.0
        %539 = vmatmul.mubr.f32.gmra.mrb[0].mxu0 %v459
        %v540 = vpop.f32.mrb[0].mxu0
        %v541 = vadd.f32 %v444, %v540
        %v542 = vpop.f32.mrb[0].mxu0
        %543 = vmatprep.mubr.f32.mxu0 0.0
        %544 = vmatmul.mubr.f32.gmra.mrb[0].mxu0 %v462
        %v545 = vpop.f32.mrb[0].mxu0
        %v546 = vadd.f32 %v449, %v545
        %v547 = vpop.f32.mrb[0].mxu0
        %548 = vdwg.mxu0
        %v549 = vtanh.pop %v531
        %v550 = vtanh.pop %v536
        %v551 = vxor.u32 %v541, 2147483648
        %v552 = vxor.u32 %v546, 2147483648
        %v553 = vmul.f32 %v551, 1.442695
        %v554 = vpow.pop %v553
        %v555 = vmul.f32 %v552, 1.442695
        %v556 = vpow.pop %v555
        %v557 = vadd.f32 %v554, 1.0
        %v558 = vadd.f32 %v556, 1.0
        %v559 = vrcp.pop %v557
        %v560 = vmul.f32 1.0, %v559
        %v561 = vrcp.pop %v558
        %v562 = vmul.f32 1.0, %v561
        %v563 = vmul.f32 %v549, %v560
        %v564 = vmul.f32 %v550, %v562
        %v565 = vld [vmem:[%s5] sm:$0xff]
        %v566 = vld [vmem:[%s5 + $0x8] sm:$0xff]
        %v567 = vld [vmem:[%s6] sm:$0xff]
        %v568 = vld [vmem:[%s6 + $0x8] sm:$0xff]
        %570 = vset.pattern.permute.xlu0 0
        %571 = vperm.xlu0 %570, %v567
        %v572 = vpop.permute.xlu0 %571
        %575 = vset.pattern.permute.xlu0 0
        %576 = vperm.xlu0 %575, %v568
        %v577 = vpop.permute.xlu0 %576
        %vm579 = vcmask 130048
        %v581 = vsel %vm579, %v565, 0
        %v584 = vsel %vm579, %v566, 0
        %586 = vmatprep.subr.mxu0 0.0
        %587 = vmatpush1.msra.mxu0 %v563
        %588 = vmatprep.subr.mxu0 0.0
        %589 = vmatpush1.msra.mxu0 %v564
        %590 = vmatprep.subr.mxu0 0.0
        %591 = vmatpush1.msra.mxu0 0.0
        %592 = vmatprep.subr.mxu0 0.0
        %593 = vmatpush1.msra.mxu0 0.0
        %594 = vmatprep.subr.mxu0 0.0
        %595 = vmatpush1.msra.mxu0 0.0
        %596 = vmatprep.subr.mxu0 0.0
        %597 = vmatpush1.msra.mxu0 0.0
        %598 = vmatprep.subr.mxu0 0.0
        %599 = vmatpush1.msra.mxu0 0.0
        %600 = vmatprep.subr.mxu0 0.0
        %601 = vmatpush1.msra.mxu0 0.0
        %602 = vmatprep.subr.mxu0 0.0
        %603 = vmatpush1.msra.mxu0 0.0
        %604 = vmatprep.subr.mxu0 0.0
        %605 = vmatpush1.msra.mxu0 0.0
        %606 = vmatprep.subr.mxu0 0.0
        %607 = vmatpush1.msra.mxu0 0.0
        %608 = vmatprep.subr.mxu0 0.0
        %609 = vmatpush1.msra.mxu0 0.0
        %610 = vmatprep.subr.mxu0 0.0
        %611 = vmatpush1.msra.mxu0 0.0
        %612 = vmatprep.subr.mxu0 0.0
        %613 = vmatpush1.msra.mxu0 0.0
        %614 = vmatprep.subr.mxu0 0.0
        %615 = vmatpush1.msra.mxu0 0.0
        %616 = vmatprep.subr.mxu0 0.0
        %617 = vmatpush1.msra.mxu0 0.0
        %618 = vmatprep.subr.mxu0 0.0
        %619 = vmatpush1.msra.mxu0 0.0
        %620 = vmatprep.subr.mxu0 0.0
        %621 = vmatpush1.msra.mxu0 0.0
        %622 = vmatprep.subr.mxu0 0.0
        %623 = vmatpush1.msra.mxu0 0.0
        %624 = vmatprep.subr.mxu0 0.0
        %625 = vmatpush1.msra.mxu0 0.0
        %626 = vmatprep.subr.mxu0 0.0
        %627 = vmatpush1.msra.mxu0 0.0
        %628 = vmatprep.subr.mxu0 0.0
        %629 = vmatpush1.msra.mxu0 0.0
        %630 = vmatprep.subr.mxu0 0.0
        %631 = vmatpush1.msra.mxu0 0.0
        %632 = vmatprep.subr.mxu0 0.0
        %633 = vmatpush1.msra.mxu0 0.0
        %634 = vmatprep.subr.mxu0 0.0
        %635 = vmatpush1.msra.mxu0 0.0
        %636 = vmatprep.subr.mxu0 0.0
        %637 = vmatpush1.msra.mxu0 0.0
        %638 = vmatprep.subr.mxu0 0.0
        %639 = vmatpush1.msra.mxu0 0.0
        %640 = vmatprep.subr.mxu0 0.0
        %641 = vmatpush1.msra.mxu0 0.0
        %642 = vmatprep.subr.mxu0 0.0
        %643 = vmatpush1.msra.mxu0 0.0
        %644 = vmatprep.subr.mxu0 0.0
        %645 = vmatpush1.msra.mxu0 0.0
        %646 = vmatprep.subr.mxu0 0.0
        %647 = vmatpush1.msra.mxu0 0.0
        %648 = vmatprep.subr.mxu0 0.0
        %649 = vmatpush1.msra.mxu0 0.0
        %650 = vmatprep.mubr.f32.mxu0 0.0
        %651 = vmatmul.mubr.f32.gmra.mrb[0].mxu0 %v581
        %v652 = vpop.f32.mrb[0].mxu0
        %v653 = vadd.f32 %v572, %v652
        %v654 = vpop.f32.mrb[0].mxu0
        %655 = vmatprep.mubr.f32.mxu0 0.0
        %656 = vmatmul.mubr.f32.gmra.mrb[0].mxu0 %v584
        %v657 = vpop.f32.mrb[0].mxu0
        %v658 = vadd.f32 %v577, %v657
        %v659 = vpop.f32.mrb[0].mxu0
        %660 = vdwg.mxu0
        %v661 = vadd.f32 %v381, %v653
        %v662 = vadd.f32 %v386, %v658
        %vm663 = vcmp.ge.s32.totalorder %v288, 2
        %vm664 = vcmp.lt.s32.totalorder %v288, 130
        %vm665 = vmand %vm663, %vm664
        %vm666 = vcmp.ge.s32.totalorder %v288, 4294967294
        %vm667 = vcmp.lt.s32.totalorder %v288, 126
        %vm668 = vmand %vm666, %vm667
        %669 = vrot.lane.b32.xlu0 %v653, 2
        %v670 = vpop.permute.xlu0 %669
        %671 = vrot.lane.b32.xlu0 %v658, 2
        %v672 = vpop.permute.xlu0 %671
        %v673 = vsel %vm665, 1, 0
        %vm674 = vcmp.eq.s32.totalorder %v673, 1
        %v675 = vsel %vm674, %v670, 0.0
        %v676 = vsel %vm674, %v672, 0.0
        %677 = vst [vmem:[#allocation2] sm:$0xff] %v675
        %678 = vst [vmem:[#allocation2 + $0x8] sm:$0xff] %v676
        %679 = vst [vmem:[#allocation2 + $0x10] sm:$0xff] %v653
        %680 = vst [vmem:[#allocation2 + $0x18] sm:$0xff] %v658
        %681 = vrot.lane.b32.xlu0 %v653, 126
        %v682 = vpop.permute.xlu0 %681
        %683 = vrot.lane.b32.xlu0 %v658, 126
        %v684 = vpop.permute.xlu0 %683
        %v685 = vsel %vm668, 1, 0
        %vm686 = vcmp.eq.s32.totalorder %v685, 1
        %v687 = vsel %vm686, %v682, 0.0
        %v688 = vsel %vm686, %v684, 0.0
        %689 = vst [vmem:[#allocation2 + $0x20] sm:$0xff] %v687
        %690 = vst [vmem:[#allocation2 + $0x28] sm:$0xff] %v688
        %s691 = scalar_lea.vmem %s3, 32
        %v692 = vld [vmem:[%s691] sm:$0xff]
        %v693 = vld [vmem:[%s691 + $0x8] sm:$0xff]
        %v694 = vld [vmem:[%s691 + $0x10] sm:$0xff]
        %v695 = vld [vmem:[%s691 + $0x18] sm:$0xff]
        %v696 = vld [vmem:[#allocation2] sm:$0xff]
        %v697 = vld [vmem:[#allocation2 + $0x8] sm:$0xff]
        %v698 = vld [vmem:[#allocation2 + $0x10] sm:$0xff]
        %v699 = vld [vmem:[#allocation2 + $0x18] sm:$0xff]
        %v700 = vld [vmem:[#allocation2 + $0x20] sm:$0xff]
        %v701 = vld [vmem:[#allocation2 + $0x28] sm:$0xff]
        %s702 = scalar_lea.vmem %s4, 32
        %v703 = vld [vmem:[%s702] sm:$0xff]
        %v704 = vld [vmem:[%s702 + $0x8] sm:$0xff]
        %v705 = vld [vmem:[%s702 + $0x10] sm:$0xff]
        %v706 = vld [vmem:[%s702 + $0x18] sm:$0xff]
        %708 = vset.pattern.permute.xlu0 0
        %709 = vperm.xlu0 %708, %v703
        %v710 = vpop.permute.xlu0 %709
        %713 = vset.pattern.permute.xlu0 0
        %714 = vperm.xlu0 %713, %v704
        %v715 = vpop.permute.xlu0 %714
        %718 = vset.pattern.permute.xlu0 0
        %719 = vperm.xlu0 %718, %v705
        %v720 = vpop.permute.xlu0 %719
        %723 = vset.pattern.permute.xlu0 0
        %724 = vperm.xlu0 %723, %v706
        %v725 = vpop.permute.xlu0 %724
        %v728 = vsel %vm451, %v692, 0
        %v731 = vsel %vm451, %v693, 0
        %v734 = vsel %vm451, %v694, 0
        %v737 = vsel %vm451, %v695, 0
        %739 = vmatprep.subr.mxu0 0.0
        %740 = vmatpush1.msra.mxu0 %v696
        %741 = vmatprep.subr.mxu0 0.0
        %742 = vmatpush1.msra.mxu0 %v697
        %743 = vmatprep.subr.mxu0 0.0
        %744 = vmatpush1.msra.mxu0 %v698
        %745 = vmatprep.subr.mxu0 0.0
        %746 = vmatpush1.msra.mxu0 %v699
        %747 = vmatprep.subr.mxu0 0.0
        %748 = vmatpush1.msra.mxu0 %v700
        %749 = vmatprep.subr.mxu0 0.0
        %750 = vmatpush1.msra.mxu0 %v701
        %751 = vmatprep.subr.mxu0 0.0
        %752 = vmatpush1.msra.mxu0 0.0
        %753 = vmatprep.subr.mxu0 0.0
        %754 = vmatpush1.msra.mxu0 0.0
        %755 = vmatprep.subr.mxu0 0.0
        %756 = vmatpush1.msra.mxu0 0.0
        %757 = vmatprep.subr.mxu0 0.0
        %758 = vmatpush1.msra.mxu0 0.0
        %759 = vmatprep.subr.mxu0 0.0
        %760 = vmatpush1.msra.mxu0 0.0
        %761 = vmatprep.subr.mxu0 0.0
        %762 = vmatpush1.msra.mxu0 0.0
        %763 = vmatprep.subr.mxu0 0.0
        %764 = vmatpush1.msra.mxu0 0.0
        %765 = vmatprep.subr.mxu0 0.0
        %766 = vmatpush1.msra.mxu0 0.0
        %767 = vmatprep.subr.mxu0 0.0
        %768 = vmatpush1.msra.mxu0 0.0
        %769 = vmatprep.subr.mxu0 0.0
        %770 = vmatpush1.msra.mxu0 0.0
        %771 = vmatprep.subr.mxu0 0.0
        %772 = vmatpush1.msra.mxu0 0.0
        %773 = vmatprep.subr.mxu0 0.0
        %774 = vmatpush1.msra.mxu0 0.0
        %775 = vmatprep.subr.mxu0 0.0
        %776 = vmatpush1.msra.mxu0 0.0
        %777 = vmatprep.subr.mxu0 0.0
        %778 = vmatpush1.msra.mxu0 0.0
        %779 = vmatprep.subr.mxu0 0.0
        %780 = vmatpush1.msra.mxu0 0.0
        %781 = vmatprep.subr.mxu0 0.0
        %782 = vmatpush1.msra.mxu0 0.0
        %783 = vmatprep.subr.mxu0 0.0
        %784 = vmatpush1.msra.mxu0 0.0
        %785 = vmatprep.subr.mxu0 0.0
        %786 = vmatpush1.msra.mxu0 0.0
        %787 = vmatprep.subr.mxu0 0.0
        %788 = vmatpush1.msra.mxu0 0.0
        %789 = vmatprep.subr.mxu0 0.0
        %790 = vmatpush1.msra.mxu0 0.0
        %791 = vmatprep.subr.mxu0 0.0
        %792 = vmatpush1.msra.mxu0 0.0
        %793 = vmatprep.subr.mxu0 0.0
        %794 = vmatpush1.msra.mxu0 0.0
        %795 = vmatprep.subr.mxu0 0.0
        %796 = vmatpush1.msra.mxu0 0.0
        %797 = vmatprep.subr.mxu0 0.0
        %798 = vmatpush1.msra.mxu0 0.0
        %799 = vmatprep.subr.mxu0 0.0
        %800 = vmatpush1.msra.mxu0 0.0
        %801 = vmatprep.subr.mxu0 0.0
        %802 = vmatpush1.msra.mxu0 0.0
        %803 = vmatprep.mubr.f32.mxu0 0.0
        %804 = vmatmul.mubr.f32.gmra.mrb[0].mxu0 %v728
        %v805 = vpop.f32.mrb[0].mxu0
        %v806 = vadd.f32 %v710, %v805
        %v807 = vpop.f32.mrb[0].mxu0
        %808 = vmatprep.mubr.f32.mxu0 0.0
        %809 = vmatmul.mubr.f32.gmra.mrb[0].mxu0 %v731
        %v810 = vpop.f32.mrb[0].mxu0
        %v811 = vadd.f32 %v715, %v810
        %v812 = vpop.f32.mrb[0].mxu0
        %813 = vmatprep.mubr.f32.mxu0 0.0
        %814 = vmatmul.mubr.f32.gmra.mrb[0].mxu0 %v734
        %v815 = vpop.f32.mrb[0].mxu0
        %v816 = vadd.f32 %v720, %v815
        %v817 = vpop.f32.mrb[0].mxu0
        %818 = vmatprep.mubr.f32.mxu0 0.0
        %819 = vmatmul.mubr.f32.gmra.mrb[0].mxu0 %v737
        %v820 = vpop.f32.mrb[0].mxu0
        %v821 = vadd.f32 %v725, %v820
        %v822 = vpop.f32.mrb[0].mxu0
        %823 = vdwg.mxu0
        %v824 = vtanh.pop %v806
        %v825 = vtanh.pop %v811
        %v826 = vxor.u32 %v816, 2147483648
        %v827 = vxor.u32 %v821, 2147483648
        %v828 = vmul.f32 %v826, 1.442695
        %v829 = vpow.pop %v828
        %v830 = vmul.f32 %v827, 1.442695
        %v831 = vpow.pop %v830
        %v832 = vadd.f32 %v829, 1.0
        %v833 = vadd.f32 %v831, 1.0
        %v834 = vrcp.pop %v832
        %v835 = vmul.f32 1.0, %v834
        %v836 = vrcp.pop %v833
        %v837 = vmul.f32 1.0, %v836
        %v838 = vmul.f32 %v824, %v835
        %v839 = vmul.f32 %v825, %v837
        %s840 = scalar_lea.vmem %s5, 16
        %v841 = vld [vmem:[%s840] sm:$0xff]
        %v842 = vld [vmem:[%s840 + $0x8] sm:$0xff]
        %s843 = scalar_lea.vmem %s6, 16
        %v844 = vld [vmem:[%s843] sm:$0xff]
        %v845 = vld [vmem:[%s843 + $0x8] sm:$0xff]
        %847 = vset.pattern.permute.xlu0 0
        %848 = vperm.xlu0 %847, %v844
        %v849 = vpop.permute.xlu0 %848
        %852 = vset.pattern.permute.xlu0 0
        %853 = vperm.xlu0 %852, %v845
        %v854 = vpop.permute.xlu0 %853
        %v857 = vsel %vm579, %v841, 0
        %v860 = vsel %vm579, %v842, 0
        %862 = vmatprep.subr.mxu0 0.0
        %863 = vmatpush1.msra.mxu0 %v838
        %864 = vmatprep.subr.mxu0 0.0
        %865 = vmatpush1.msra.mxu0 %v839
        %866 = vmatprep.subr.mxu0 0.0
        %867 = vmatpush1.msra.mxu0 0.0
        %868 = vmatprep.subr.mxu0 0.0
        %869 = vmatpush1.msra.mxu0 0.0
        %870 = vmatprep.subr.mxu0 0.0
        %871 = vmatpush1.msra.mxu0 0.0
        %872 = vmatprep.subr.mxu0 0.0
        %873 = vmatpush1.msra.mxu0 0.0
        %874 = vmatprep.subr.mxu0 0.0
        %875 = vmatpush1.msra.mxu0 0.0
        %876 = vmatprep.subr.mxu0 0.0
        %877 = vmatpush1.msra.mxu0 0.0
        %878 = vmatprep.subr.mxu0 0.0
        %879 = vmatpush1.msra.mxu0 0.0
        %880 = vmatprep.subr.mxu0 0.0
        %881 = vmatpush1.msra.mxu0 0.0
        %882 = vmatprep.subr.mxu0 0.0
        %883 = vmatpush1.msra.mxu0 0.0
        %884 = vmatprep.subr.mxu0 0.0
        %885 = vmatpush1.msra.mxu0 0.0
        %886 = vmatprep.subr.mxu0 0.0
        %887 = vmatpush1.msra.mxu0 0.0
        %888 = vmatprep.subr.mxu0 0.0
        %889 = vmatpush1.msra.mxu0 0.0
        %890 = vmatprep.subr.mxu0 0.0
        %891 = vmatpush1.msra.mxu0 0.0
        %892 = vmatprep.subr.mxu0 0.0
        %893 = vmatpush1.msra.mxu0 0.0
        %894 = vmatprep.subr.mxu0 0.0
        %895 = vmatpush1.msra.mxu0 0.0
        %896 = vmatprep.subr.mxu0 0.0
        %897 = vmatpush1.msra.mxu0 0.0
        %898 = vmatprep.subr.mxu0 0.0
        %899 = vmatpush1.msra.mxu0 0.0
        %900 = vmatprep.subr.mxu0 0.0
        %901 = vmatpush1.msra.mxu0 0.0
        %902 = vmatprep.subr.mxu0 0.0
        %903 = vmatpush1.msra.mxu0 0.0
        %904 = vmatprep.subr.mxu0 0.0
        %905 = vmatpush1.msra.mxu0 0.0
        %906 = vmatprep.subr.mxu0 0.0
        %907 = vmatpush1.msra.mxu0 0.0
        %908 = vmatprep.subr.mxu0 0.0
        %909 = vmatpush1.msra.mxu0 0.0
        %910 = vmatprep.subr.mxu0 0.0
        %911 = vmatpush1.msra.mxu0 0.0
        %912 = vmatprep.subr.mxu0 0.0
        %913 = vmatpush1.msra.mxu0 0.0
        %914 = vmatprep.subr.mxu0 0.0
        %915 = vmatpush1.msra.mxu0 0.0
        %916 = vmatprep.subr.mxu0 0.0
        %917 = vmatpush1.msra.mxu0 0.0
        %918 = vmatprep.subr.mxu0 0.0
        %919 = vmatpush1.msra.mxu0 0.0
        %920 = vmatprep.subr.mxu0 0.0
        %921 = vmatpush1.msra.mxu0 0.0
        %922 = vmatprep.subr.mxu0 0.0
        %923 = vmatpush1.msra.mxu0 0.0
        %924 = vmatprep.subr.mxu0 0.0
        %925 = vmatpush1.msra.mxu0 0.0
        %926 = vmatprep.mubr.f32.mxu0 0.0
        %927 = vmatmul.mubr.f32.gmra.mrb[0].mxu0 %v857
        %v928 = vpop.f32.mrb[0].mxu0
        %v929 = vadd.f32 %v849, %v928
        %v930 = vpop.f32.mrb[0].mxu0
        %931 = vmatprep.mubr.f32.mxu0 0.0
        %932 = vmatmul.mubr.f32.gmra.mrb[0].mxu0 %v860
        %v933 = vpop.f32.mrb[0].mxu0
        %v934 = vadd.f32 %v854, %v933
        %v935 = vpop.f32.mrb[0].mxu0
        %936 = vdwg.mxu0
        %v937 = vadd.f32 %v661, %v929
        %v938 = vadd.f32 %v662, %v934
        %vm939 = vcmp.ge.s32.totalorder %v288, 4
        %vm940 = vcmp.lt.s32.totalorder %v288, 132
        %vm941 = vmand %vm939, %vm940
        %vm942 = vcmp.ge.s32.totalorder %v288, 4294967292
        %vm943 = vcmp.lt.s32.totalorder %v288, 124
        %vm944 = vmand %vm942, %vm943
        %945 = vrot.lane.b32.xlu0 %v929, 4
        %v946 = vpop.permute.xlu0 %945
        %947 = vrot.lane.b32.xlu0 %v934, 4
        %v948 = vpop.permute.xlu0 %947
        %v949 = vsel %vm941, 1, 0
        %vm950 = vcmp.eq.s32.totalorder %v949, 1
        %v951 = vsel %vm950, %v946, 0.0
        %v952 = vsel %vm950, %v948, 0.0
        %953 = vst [vmem:[#allocation2] sm:$0xff] %v951
        %954 = vst [vmem:[#allocation2 + $0x8] sm:$0xff] %v952
        %955 = vst [vmem:[#allocation2 + $0x10] sm:$0xff] %v929
        %956 = vst [vmem:[#allocation2 + $0x18] sm:$0xff] %v934
        %957 = vrot.lane.b32.xlu0 %v929, 124
        %v958 = vpop.permute.xlu0 %957
        %959 = vrot.lane.b32.xlu0 %v934, 124
        %v960 = vpop.permute.xlu0 %959
        %v961 = vsel %vm944, 1, 0
        %vm962 = vcmp.eq.s32.totalorder %v961, 1
        %v963 = vsel %vm962, %v958, 0.0
        %v964 = vsel %vm962, %v960, 0.0
        %965 = vst [vmem:[#allocation2 + $0x20] sm:$0xff] %v963
        %966 = vst [vmem:[#allocation2 + $0x28] sm:$0xff] %v964
        %s967 = scalar_lea.vmem %s3, 64
        %v968 = vld [vmem:[%s967] sm:$0xff]
        %v969 = vld [vmem:[%s967 + $0x8] sm:$0xff]
        %v970 = vld [vmem:[%s967 + $0x10] sm:$0xff]
        %v971 = vld [vmem:[%s967 + $0x18] sm:$0xff]
        %v972 = vld [vmem:[#allocation2] sm:$0xff]
        %v973 = vld [vmem:[#allocation2 + $0x8] sm:$0xff]
        %v974 = vld [vmem:[#allocation2 + $0x10] sm:$0xff]
        %v975 = vld [vmem:[#allocation2 + $0x18] sm:$0xff]
        %v976 = vld [vmem:[#allocation2 + $0x20] sm:$0xff]
        %v977 = vld [vmem:[#allocation2 + $0x28] sm:$0xff]
        %s978 = scalar_lea.vmem %s4, 64
        %v979 = vld [vmem:[%s978] sm:$0xff]
        %v980 = vld [vmem:[%s978 + $0x8] sm:$0xff]
        %v981 = vld [vmem:[%s978 + $0x10] sm:$0xff]
        %v982 = vld [vmem:[%s978 + $0x18] sm:$0xff]
        %984 = vset.pattern.permute.xlu0 0
        %985 = vperm.xlu0 %984, %v979
        %v986 = vpop.permute.xlu0 %985
        %989 = vset.pattern.permute.xlu0 0
        %990 = vperm.xlu0 %989, %v980
        %v991 = vpop.permute.xlu0 %990
        %994 = vset.pattern.permute.xlu0 0
        %995 = vperm.xlu0 %994, %v981
        %v996 = vpop.permute.xlu0 %995
        %999 = vset.pattern.permute.xlu0 0
        %1000 = vperm.xlu0 %999, %v982
        %v1001 = vpop.permute.xlu0 %1000
        %v1004 = vsel %vm451, %v968, 0
        %v1007 = vsel %vm451, %v969, 0
        %v1010 = vsel %vm451, %v970, 0
        %v1013 = vsel %vm451, %v971, 0
        %1015 = vmatprep.subr.mxu0 0.0
        %1016 = vmatpush1.msra.mxu0 %v972
        %1017 = vmatprep.subr.mxu0 0.0
        %1018 = vmatpush1.msra.mxu0 %v973
        %1019 = vmatprep.subr.mxu0 0.0
        %1020 = vmatpush1.msra.mxu0 %v974
        %1021 = vmatprep.subr.mxu0 0.0
        %1022 = vmatpush1.msra.mxu0 %v975
        %1023 = vmatprep.subr.mxu0 0.0
        %1024 = vmatpush1.msra.mxu0 %v976
        %1025 = vmatprep.subr.mxu0 0.0
        %1026 = vmatpush1.msra.mxu0 %v977
        %1027 = vmatprep.subr.mxu0 0.0
        %1028 = vmatpush1.msra.mxu0 0.0
        %1029 = vmatprep.subr.mxu0 0.0
        %1030 = vmatpush1.msra.mxu0 0.0
        %1031 = vmatprep.subr.mxu0 0.0
        %1032 = vmatpush1.msra.mxu0 0.0
        %1033 = vmatprep.subr.mxu0 0.0
        %1034 = vmatpush1.msra.mxu0 0.0
        %1035 = vmatprep.subr.mxu0 0.0
        %1036 = vmatpush1.msra.mxu0 0.0
        %1037 = vmatprep.subr.mxu0 0.0
        %1038 = vmatpush1.msra.mxu0 0.0
        %1039 = vmatprep.subr.mxu0 0.0
        %1040 = vmatpush1.msra.mxu0 0.0
        %1041 = vmatprep.subr.mxu0 0.0
        %1042 = vmatpush1.msra.mxu0 0.0
        %1043 = vmatprep.subr.mxu0 0.0
        %1044 = vmatpush1.msra.mxu0 0.0
        %1045 = vmatprep.subr.mxu0 0.0
        %1046 = vmatpush1.msra.mxu0 0.0
        %1047 = vmatprep.subr.mxu0 0.0
        %1048 = vmatpush1.msra.mxu0 0.0
        %1049 = vmatprep.subr.mxu0 0.0
        %1050 = vmatpush1.msra.mxu0 0.0
        %1051 = vmatprep.subr.mxu0 0.0
        %1052 = vmatpush1.msra.mxu0 0.0
        %1053 = vmatprep.subr.mxu0 0.0
        %1054 = vmatpush1.msra.mxu0 0.0
        %1055 = vmatprep.subr.mxu0 0.0
        %1056 = vmatpush1.msra.mxu0 0.0
        %1057 = vmatprep.subr.mxu0 0.0
        %1058 = vmatpush1.msra.mxu0 0.0
        %1059 = vmatprep.subr.mxu0 0.0
        %1060 = vmatpush1.msra.mxu0 0.0
        %1061 = vmatprep.subr.mxu0 0.0
        %1062 = vmatpush1.msra.mxu0 0.0
        %1063 = vmatprep.subr.mxu0 0.0
        %1064 = vmatpush1.msra.mxu0 0.0
        %1065 = vmatprep.subr.mxu0 0.0
        %1066 = vmatpush1.msra.mxu0 0.0
        %1067 = vmatprep.subr.mxu0 0.0
        %1068 = vmatpush1.msra.mxu0 0.0
        %1069 = vmatprep.subr.mxu0 0.0
        %1070 = vmatpush1.msra.mxu0 0.0
        %1071 = vmatprep.subr.mxu0 0.0
        %1072 = vmatpush1.msra.mxu0 0.0
        %1073 = vmatprep.subr.mxu0 0.0
        %1074 = vmatpush1.msra.mxu0 0.0
        %1075 = vmatprep.subr.mxu0 0.0
        %1076 = vmatpush1.msra.mxu0 0.0
        %1077 = vmatprep.subr.mxu0 0.0
        %1078 = vmatpush1.msra.mxu0 0.0
        %1079 = vmatprep.mubr.f32.mxu0 0.0
        %1080 = vmatmul.mubr.f32.gmra.mrb[0].mxu0 %v1004
        %v1081 = vpop.f32.mrb[0].mxu0
        %v1082 = vadd.f32 %v986, %v1081
        %v1083 = vpop.f32.mrb[0].mxu0
        %1084 = vmatprep.mubr.f32.mxu0 0.0
        %1085 = vmatmul.mubr.f32.gmra.mrb[0].mxu0 %v1007
        %v1086 = vpop.f32.mrb[0].mxu0
        %v1087 = vadd.f32 %v991, %v1086
        %v1088 = vpop.f32.mrb[0].mxu0
        %1089 = vmatprep.mubr.f32.mxu0 0.0
        %1090 = vmatmul.mubr.f32.gmra.mrb[0].mxu0 %v1010
        %v1091 = vpop.f32.mrb[0].mxu0
        %v1092 = vadd.f32 %v996, %v1091
        %v1093 = vpop.f32.mrb[0].mxu0
        %1094 = vmatprep.mubr.f32.mxu0 0.0
        %1095 = vmatmul.mubr.f32.gmra.mrb[0].mxu0 %v1013
        %v1096 = vpop.f32.mrb[0].mxu0
        %v1097 = vadd.f32 %v1001, %v1096
        %v1098 = vpop.f32.mrb[0].mxu0
        %1099 = vdwg.mxu0
        %v1100 = vtanh.pop %v1082
        %v1101 = vtanh.pop %v1087
        %v1102 = vxor.u32 %v1092, 2147483648
        %v1103 = vxor.u32 %v1097, 2147483648
        %v1104 = vmul.f32 %v1102, 1.442695
        %v1105 = vpow.pop %v1104
        %v1106 = vmul.f32 %v1103, 1.442695
        %v1107 = vpow.pop %v1106
        %v1108 = vadd.f32 %v1105, 1.0
        %v1109 = vadd.f32 %v1107, 1.0
        %v1110 = vrcp.pop %v1108
        %v1111 = vmul.f32 1.0, %v1110
        %v1112 = vrcp.pop %v1109
        %v1113 = vmul.f32 1.0, %v1112
        %v1114 = vmul.f32 %v1100, %v1111
        %v1115 = vmul.f32 %v1101, %v1113
        %s1116 = scalar_lea.vmem %s5, 32
        %v1117 = vld [vmem:[%s1116] sm:$0xff]
        %v1118 = vld [vmem:[%s1116 + $0x8] sm:$0xff]
        %s1119 = scalar_lea.vmem %s6, 32
        %v1120 = vld [vmem:[%s1119] sm:$0xff]
        %v1121 = vld [vmem:[%s1119 + $0x8] sm:$0xff]
        %1123 = vset.pattern.permute.xlu0 0
        %1124 = vperm.xlu0 %1123, %v1120
        %v1125 = vpop.permute.xlu0 %1124
        %1128 = vset.pattern.permute.xlu0 0
        %1129 = vperm.xlu0 %1128, %v1121
        %v1130 = vpop.permute.xlu0 %1129
        %v1133 = vsel %vm579, %v1117, 0
        %v1136 = vsel %vm579, %v1118, 0
        %1138 = vmatprep.subr.mxu0 0.0
        %1139 = vmatpush1.msra.mxu0 %v1114
        %1140 = vmatprep.subr.mxu0 0.0
        %1141 = vmatpush1.msra.mxu0 %v1115
        %1142 = vmatprep.subr.mxu0 0.0
        %1143 = vmatpush1.msra.mxu0 0.0
        %1144 = vmatprep.subr.mxu0 0.0
        %1145 = vmatpush1.msra.mxu0 0.0
        %1146 = vmatprep.subr.mxu0 0.0
        %1147 = vmatpush1.msra.mxu0 0.0
        %1148 = vmatprep.subr.mxu0 0.0
        %1149 = vmatpush1.msra.mxu0 0.0
        %1150 = vmatprep.subr.mxu0 0.0
        %1151 = vmatpush1.msra.mxu0 0.0
        %1152 = vmatprep.subr.mxu0 0.0
        %1153 = vmatpush1.msra.mxu0 0.0
        %1154 = vmatprep.subr.mxu0 0.0
        %1155 = vmatpush1.msra.mxu0 0.0
        %1156 = vmatprep.subr.mxu0 0.0
        %1157 = vmatpush1.msra.mxu0 0.0
        %1158 = vmatprep.subr.mxu0 0.0
        %1159 = vmatpush1.msra.mxu0 0.0
        %1160 = vmatprep.subr.mxu0 0.0
        %1161 = vmatpush1.msra.mxu0 0.0
        %1162 = vmatprep.subr.mxu0 0.0
        %1163 = vmatpush1.msra.mxu0 0.0
        %1164 = vmatprep.subr.mxu0 0.0
        %1165 = vmatpush1.msra.mxu0 0.0
        %1166 = vmatprep.subr.mxu0 0.0
        %1167 = vmatpush1.msra.mxu0 0.0
        %1168 = vmatprep.subr.mxu0 0.0
        %1169 = vmatpush1.msra.mxu0 0.0
        %1170 = vmatprep.subr.mxu0 0.0
        %1171 = vmatpush1.msra.mxu0 0.0
        %1172 = vmatprep.subr.mxu0 0.0
        %1173 = vmatpush1.msra.mxu0 0.0
        %1174 = vmatprep.subr.mxu0 0.0
        %1175 = vmatpush1.msra.mxu0 0.0
        %1176 = vmatprep.subr.mxu0 0.0
        %1177 = vmatpush1.msra.mxu0 0.0
        %1178 = vmatprep.subr.mxu0 0.0
        %1179 = vmatpush1.msra.mxu0 0.0
        %1180 = vmatprep.subr.mxu0 0.0
        %1181 = vmatpush1.msra.mxu0 0.0
        %1182 = vmatprep.subr.mxu0 0.0
        %1183 = vmatpush1.msra.mxu0 0.0
        %1184 = vmatprep.subr.mxu0 0.0
        %1185 = vmatpush1.msra.mxu0 0.0
        %1186 = vmatprep.subr.mxu0 0.0
        %1187 = vmatpush1.msra.mxu0 0.0
        %1188 = vmatprep.subr.mxu0 0.0
        %1189 = vmatpush1.msra.mxu0 0.0
        %1190 = vmatprep.subr.mxu0 0.0
        %1191 = vmatpush1.msra.mxu0 0.0
        %1192 = vmatprep.subr.mxu0 0.0
        %1193 = vmatpush1.msra.mxu0 0.0
        %1194 = vmatprep.subr.mxu0 0.0
        %1195 = vmatpush1.msra.mxu0 0.0
        %1196 = vmatprep.subr.mxu0 0.0
        %1197 = vmatpush1.msra.mxu0 0.0
        %1198 = vmatprep.subr.mxu0 0.0
        %1199 = vmatpush1.msra.mxu0 0.0
        %1200 = vmatprep.subr.mxu0 0.0
        %1201 = vmatpush1.msra.mxu0 0.0
        %1202 = vmatprep.mubr.f32.mxu0 0.0
        %1203 = vmatmul.mubr.f32.gmra.mrb[0].mxu0 %v1133
        %v1204 = vpop.f32.mrb[0].mxu0
        %v1205 = vadd.f32 %v1125, %v1204
        %v1206 = vpop.f32.mrb[0].mxu0
        %1207 = vmatprep.mubr.f32.mxu0 0.0
        %1208 = vmatmul.mubr.f32.gmra.mrb[0].mxu0 %v1136
        %v1209 = vpop.f32.mrb[0].mxu0
        %v1210 = vadd.f32 %v1130, %v1209
        %v1211 = vpop.f32.mrb[0].mxu0
        %1212 = vdwg.mxu0
        %v1213 = vadd.f32 %v937, %v1205
        %v1214 = vadd.f32 %v938, %v1210
        %1215 = vst [vmem:[%s269] sm:$0xff] %v1213
        %1216 = vst [vmem:[%s269 + $0x8] sm:$0xff] %v1214
        %s1217 = sand.u32 %s181, 1
        %s1218 = scalar_lea.sflag [#allocation4], %s1217
        %s1219 = sand.u32 %s181, 1
        %s1220 = smul.addr %s1219, 16
        %s1221 = scalar_lea.vmem [#allocation3], %s1220
        // Predicated region
        $region49: #{tpu_custom_call.1} parent=47 // pred_check
          %p1222 = pneg %p191
        $region50: #{tpu_custom_call.1} parent=47 // pred_check_branch
          %1224 = sbr.rel (%p1222) target = $region52
        $region51: #{tpu_custom_call.1} parent=47 // pred_region
          %s1226 = ssub.s32 256, 256
          %1227 = vsyncadd %s1218, %s1226
          %s1228 = smul.addr %s21, 128
          %s1229 = scalar_lea.hbm %s7, %s1228
          %s1230 = sshll.u32 %s1221, 4
          %s1231 = int_to_ptr.vmem [resolvable:$true] %s1230
          %1236 = dma.vmem_to_hbm [thread:$0]  %s1231, 256, %s1229, %s1218, 128, 256, 8
        $region52: #{tpu_custom_call.1} parent=47 // pred_fallthru
          _
      $region48: #{tpu_custom_call.1} parent=5 // pred_fallthru
        _
      %p1237 = scmp.le.s32.totalorder 2, %s16
      // Predicated region
      $region53: #{tpu_custom_call.1} parent=5 // pred_check
        %p1238 = pneg %p1237
      $region54: #{tpu_custom_call.1} parent=5 // pred_check_branch
        %1240 = sbr.rel (%p1238) target = $region56
      $region55: #{tpu_custom_call.1} parent=5 // pred_region
        %s1241 = ssub.s32 %s16, 2
        // Predicated region
        $region57: #{tpu_custom_call.1} parent=55 // pred_check
          %p1242 = pneg %p197
        $region58: #{tpu_custom_call.1} parent=55 // pred_check_branch
          %1244 = sbr.rel (%p1242) target = $region60
        $region59: #{tpu_custom_call.1} parent=55 // pred_region
          %s1245 = sand.u32 %s182, 1
          %s1246 = scalar_lea.sflag [#allocation4], %s1245
          %s1247 = sand.u32 %s182, 1
          %s1248 = smul.addr %s1247, 16
          %s1249 = scalar_lea.vmem [#allocation3], %s1248
          %1250 = dma.done %s1246, 256
        $region60: #{tpu_custom_call.1} parent=55 // pred_fallthru
          _
      $region56: #{tpu_custom_call.1} parent=5 // pred_fallthru
        _
    $region6: #{tpu_custom_call.1} parent=1 // loop_footer
      %s20 = sadd.s32 1, %s16
    $region7: #{tpu_custom_call.1} parent=1 // loop_footer_branch
      %15 = sbr.rel target = $region3
    $region8: #{tpu_custom_call.1} parent=1 // loop_exit
      _
    %1251 = vsyncpa [#allocation4], 1
    %s1252 = scalar_lea.sflag [#allocation4], 1
    %1253 = vsyncpa %s1252, 1

</llo_original>
